<compile_context>
chip_gen: v7x
topology: tpu7x:2x2x1
jax: 0.10.0
libtpu: 0.0.40
codegen_flags: <defaults>
</compile_context>

<pallas_src>
import math

import jax
import jax.numpy as jnp
from jax import lax
from jax.experimental import pallas as pl
from jax.experimental.pallas import tpu as pltpu


def _mha_kernel(x_ref, wq_ref, wk_ref, wv_ref, wo_ref, bo_ref, o_ref):
    # x_ref:  (Bt, T, d_in)            bf16
    # wq_ref: (d_in, d_out)            bf16 (pre-scaled by 1/sqrt(head_dim))
    # wk_ref: (d_in, d_out)            bf16
    # wv_ref: (d_in, d_out)            bf16
    # wo_ref: (H, hd, d_out_pad)       bf16 (per-head row blocks of W_o.T, zero-padded lanes)
    # bo_ref: (1, d_out_pad)           f32
    # o_ref:  (Bt, T, d_out_pad)
    bt, seq, d_in = x_ref.shape
    num_heads, head_dim, d_out_pad = wo_ref.shape
    cdt = x_ref.dtype  # MXU operand dtype (bf16), f32 accumulation everywhere

    # Full-width projections: one lane-aligned dot per Q/K/V, all heads at once.
    x2 = x_ref[...].reshape(bt * seq, d_in)                       # leading-dim merge (layout-preserving)
    q = jnp.dot(x2, wq_ref[...], preferred_element_type=jnp.float32).astype(cdt)
    k = jnp.dot(x2, wk_ref[...], preferred_element_type=jnp.float32).astype(cdt)
    v = jnp.dot(x2, wv_ref[...], preferred_element_type=jnp.float32).astype(cdt)
    q = q.reshape(bt, seq, num_heads * head_dim)
    k = k.reshape(bt, seq, num_heads * head_dim)
    v = v.reshape(bt, seq, num_heads * head_dim)

    # Causal mask built once per batch block, reused by every head.
    row = lax.broadcasted_iota(jnp.int32, (1, seq, seq), 1)
    col = lax.broadcasted_iota(jnp.int32, (1, seq, seq), 2)
    causal = col <= row                                           # keep diagonal -> no NaN rows

    out_acc = jnp.zeros((bt * seq, d_out_pad), jnp.float32)
    for h in range(num_heads):                                    # static unrolled head loop
        sl = slice(h * head_dim, (h + 1) * head_dim)
        q_h, k_h, v_h = q[..., sl], k[..., sl], v[..., sl]

        s = jnp.einsum("bqd,bkd->bqk", q_h, k_h,
                       preferred_element_type=jnp.float32)        # (Bt, T, T) f32, pre-scaled
        s = jnp.where(causal, s, -jnp.inf)

        m = jnp.max(s, axis=-1, keepdims=True)
        p = jnp.exp(s - m)
        denom = jnp.sum(p, axis=-1, keepdims=True)

        # Softmax normalization folded into the (much smaller) context tensor.
        ctx = jnp.einsum("bqk,bkd->bqd", p.astype(cdt), v_h,
                         preferred_element_type=jnp.float32)      # (Bt, T, hd) f32
        ctx = ctx * pl.reciprocal(denom, approx=True)             # EUP reciprocal, VALU-free

        # out += ctx_h @ (W_o.T)[h*hd:(h+1)*hd, :]  (padded to d_out_pad lanes)
        ctx2 = ctx.reshape(bt * seq, head_dim).astype(cdt)
        out_acc = out_acc + jnp.dot(ctx2, wo_ref[h],
                                    preferred_element_type=jnp.float32)

    out = out_acc + bo_ref[...]                                   # (Bt*T, d_out_pad) + (1, d_out_pad)
    o_ref[...] = out.reshape(bt, seq, d_out_pad).astype(o_ref.dtype)


def mha_forward(x, wq, wk, wv, wo, bo, *, num_heads, block_b=None,
                compute_dtype=jnp.bfloat16):
    """Forward pass of Ch03_MHA. Weights in PyTorch (out_features, in_features) layout."""
    B, T, d_in = x.shape
    d_out = wq.shape[0]
    assert d_out % num_heads == 0
    hd = d_out // num_heads

    kind = ""
    try:
        kind = jax.devices()[0].device_kind.lower()
    except Exception:
        pass
    is_v7x = "v7" in kind

    if block_b is None:
        # v7x: 2 TensorCores -> keep >= 2 parallel batch blocks.
        # v5e/v6e: single TC -> one fat step (block_b = B) to amortize grid overhead.
        block_b = B // 2 if (is_v7x and B % 2 == 0 and B >= 2) else B
    assert B % block_b == 0

    scale = 1.0 / math.sqrt(hd)

    # Pre-transpose weights once (free XLA ops); fold the softmax scale into W_q.
    wq_t = (wq.T * scale).astype(compute_dtype)                   # (d_in, d_out)
    wk_t = wk.T.astype(compute_dtype)                             # (d_in, d_out)
    wv_t = wv.T.astype(compute_dtype)                             # (d_in, d_out)

    # Lane-dense output: pad out-projection columns + bias up to a multiple of 128 lanes so
    # the kernel's stores are unmasked full-lane vst; slice the padding off afterwards.
    d_out_pad = max(128, ((d_out + 127) // 128) * 128)
    wo_h = wo.T.reshape(num_heads, hd, d_out)                     # per-head row blocks of W_o.T
    wo_h = jnp.pad(wo_h, ((0, 0), (0, 0), (0, d_out_pad - d_out))).astype(compute_dtype)
    bo_p = jnp.pad(bo, (0, d_out_pad - d_out)).reshape(1, d_out_pad).astype(jnp.float32)

    x_c = x.astype(compute_dtype)

    grid = (B // block_b,)
    vmem_limit = (48 << 20) if is_v7x else (64 << 20)

    out_padded = pl.pallas_call(
        _mha_kernel,
        out_shape=jax.ShapeDtypeStruct((B, T, d_out_pad), x.dtype),
        grid_spec=pltpu.PrefetchScalarGridSpec(
            num_scalar_prefetch=0,
            grid=grid,
            in_specs=[
                pl.BlockSpec((block_b, T, d_in), lambda b: (b, 0, 0)),
                # Tiny weights stay fully VMEM-resident (constant block index, no re-DMA).
                pl.BlockSpec((d_in, d_out), lambda b: (0, 0)),
                pl.BlockSpec((d_in, d_out), lambda b: (0, 0)),
                pl.BlockSpec((d_in, d_out), lambda b: (0, 0)),
                pl.BlockSpec((num_heads, hd, d_out_pad), lambda b: (0, 0, 0)),
                pl.BlockSpec((1, d_out_pad), lambda b: (0, 0)),
            ],
            out_specs=pl.BlockSpec((block_b, T, d_out_pad), lambda b: (b, 0, 0)),
        ),
        compiler_params=pltpu.CompilerParams(
            dimension_semantics=("parallel",),
            vmem_limit_bytes=vmem_limit,
        ),
    )(x_c, wq_t, wk_t, wv_t, wo_h, bo_p)

    return out_padded[..., :d_out]


def reference_mha(x, wq, wk, wv, wo, bo, *, num_heads):
    """Pure-JAX f32 reference mirroring the PyTorch forward exactly."""
    B, T, d_in = x.shape
    d_out = wq.shape[0]
    hd = d_out // num_heads
    q = x @ wq.T
    k = x @ wk.T
    v = x @ wv.T
    q = q.reshape(B, T, num_heads, hd).transpose(0, 2, 1, 3)
    k = k.reshape(B, T, num_heads, hd).transpose(0, 2, 1, 3)
    v = v.reshape(B, T, num_heads, hd).transpose(0, 2, 1, 3)
    s = jnp.einsum("bhqd,bhkd->bhqk", q, k)
    mask = jnp.triu(jnp.ones((T, T), dtype=bool), k=1)
    s = jnp.where(mask, -jnp.inf, s)
    w = jax.nn.softmax(s / math.sqrt(hd), axis=-1)
    ctx = jnp.einsum("bhqk,bhkd->bhqd", w, v)
    ctx = ctx.transpose(0, 2, 1, 3).reshape(B, T, d_out)
    return ctx @ wo.T + bo


if __name__ == "__main__":
    # Small shapes consistent with the module: batch=2, seq=8, d_in=32, d_out=32, heads=4
    B, T, D_IN, D_OUT, NUM_HEADS = 2, 8, 32, 32, 4

    key = jax.random.PRNGKey(0)
    kx, kq, kk, kv, ko, kb = jax.random.split(key, 6)

    x = jax.random.normal(kx, (B, T, D_IN), dtype=jnp.float32)
    # Deterministic synthetic parameters (PyTorch Linear weight shape: (out, in))
    wq = jax.random.normal(kq, (D_OUT, D_IN), dtype=jnp.float32) * 0.05
    wk = jax.random.normal(kk, (D_OUT, D_IN), dtype=jnp.float32) * 0.05
    wv = jax.random.normal(kv, (D_OUT, D_IN), dtype=jnp.float32) * 0.05
    wo = jax.random.normal(ko, (D_OUT, D_OUT), dtype=jnp.float32) * 0.05
    bo = jax.random.normal(kb, (D_OUT,), dtype=jnp.float32) * 0.05

    # block_b=None -> auto: B on single-TC chips (v5e/v6e), B//2 on v7x (2 TensorCores).
    out = mha_forward(x, wq, wk, wv, wo, bo, num_heads=NUM_HEADS)
    out = jax.block_until_ready(out)

    ref = reference_mha(x, wq, wk, wv, wo, bo, num_heads=NUM_HEADS)
    assert out.shape == (B, T, D_OUT)
    # Tolerance sized for bf16 MXU operands with f32 accumulation vs. the pure-f32 reference.
    assert jnp.allclose(out, ref, atol=2e-2, rtol=2e-2), "mismatch vs reference"

    print("KERNEL_OK")
</pallas_src>

<mosaic_0001>
module attributes {stable_mosaic.version = 11 : i64} {
  func.func @_mha_kernel(%arg0: i32, %arg1: memref<2x8x32xbf16, #tpu.memory_space<vmem>>, %arg2: memref<32x32xbf16, #tpu.memory_space<vmem>>, %arg3: memref<32x32xbf16, #tpu.memory_space<vmem>>, %arg4: memref<32x32xbf16, #tpu.memory_space<vmem>>, %arg5: memref<4x8x128xbf16, #tpu.memory_space<vmem>>, %arg6: memref<1x128xf32, #tpu.memory_space<vmem>>, %arg7: memref<2x8x128xf32, #tpu.memory_space<vmem>>) attributes {dimension_semantics = [#tpu.dimension_semantics<parallel>], iteration_bounds = array<i64: 1>, scalar_prefetch = 0 : i64, scratch_operands = 0 : i64, tpu.core_type = #tpu.core_type<tc>, window_params = [{transform_indices = @transform_0, window_bounds = array<i64: 2, 8, 32>}, {pipeline_mode = #tpu.pipeline_mode<synchronous>, transform_indices = @transform_1, window_bounds = array<i64: 32, 32>}, {pipeline_mode = #tpu.pipeline_mode<synchronous>, transform_indices = @transform_2, window_bounds = array<i64: 32, 32>}, {pipeline_mode = #tpu.pipeline_mode<synchronous>, transform_indices = @transform_3, window_bounds = array<i64: 32, 32>}, {pipeline_mode = #tpu.pipeline_mode<synchronous>, transform_indices = @transform_4, window_bounds = array<i64: 4, 8, 128>}, {pipeline_mode = #tpu.pipeline_mode<synchronous>, transform_indices = @transform_5, window_bounds = array<i64: 1, 128>}, {transform_indices = @transform_6, window_bounds = array<i64: 2, 8, 128>}]} {
    %c0 = arith.constant 0 : index
    %c0_0 = arith.constant 0 : index
    %c0_1 = arith.constant 0 : index
    %0 = vector.load %arg1[%c0, %c0_0, %c0_1] : memref<2x8x32xbf16, #tpu.memory_space<vmem>>, vector<2x8x32xbf16>
    %1 = vector.shape_cast %0 : vector<2x8x32xbf16> to vector<16x32xbf16>
    %c0_2 = arith.constant 0 : index
    %c0_3 = arith.constant 0 : index
    %2 = vector.load %arg2[%c0_2, %c0_3] : memref<32x32xbf16, #tpu.memory_space<vmem>>, vector<32x32xbf16>
    %cst = arith.constant dense<0.000000e+00> : vector<16x32xf32>
    %3 = tpu.matmul %1, %2, %cst {dimension_numbers = #tpu.dot_dimension_numbers<[1], [0], [0], [1], [0, 0, 1, 1], [], []>} : vector<16x32xbf16>, vector<32x32xbf16>, vector<16x32xf32> -> vector<16x32xf32>
    %4 = arith.truncf %3 : vector<16x32xf32> to vector<16x32xbf16>
    %c0_4 = arith.constant 0 : index
    %c0_5 = arith.constant 0 : index
    %5 = vector.load %arg3[%c0_4, %c0_5] : memref<32x32xbf16, #tpu.memory_space<vmem>>, vector<32x32xbf16>
    %cst_6 = arith.constant dense<0.000000e+00> : vector<16x32xf32>
    %6 = tpu.matmul %1, %5, %cst_6 {dimension_numbers = #tpu.dot_dimension_numbers<[1], [0], [0], [1], [0, 0, 1, 1], [], []>} : vector<16x32xbf16>, vector<32x32xbf16>, vector<16x32xf32> -> vector<16x32xf32>
    %7 = arith.truncf %6 : vector<16x32xf32> to vector<16x32xbf16>
    %c0_7 = arith.constant 0 : index
    %c0_8 = arith.constant 0 : index
    %8 = vector.load %arg4[%c0_7, %c0_8] : memref<32x32xbf16, #tpu.memory_space<vmem>>, vector<32x32xbf16>
    %cst_9 = arith.constant dense<0.000000e+00> : vector<16x32xf32>
    %9 = tpu.matmul %1, %8, %cst_9 {dimension_numbers = #tpu.dot_dimension_numbers<[1], [0], [0], [1], [0, 0, 1, 1], [], []>} : vector<16x32xbf16>, vector<32x32xbf16>, vector<16x32xf32> -> vector<16x32xf32>
    %10 = arith.truncf %9 : vector<16x32xf32> to vector<16x32xbf16>
    %11 = vector.shape_cast %4 : vector<16x32xbf16> to vector<2x8x32xbf16>
    %12 = vector.shape_cast %7 : vector<16x32xbf16> to vector<2x8x32xbf16>
    %13 = vector.shape_cast %10 : vector<16x32xbf16> to vector<2x8x32xbf16>
    %14 = tpu.iota {dimensions = array<i32: 1>} : vector<1x8x8xi32>
    %15 = tpu.iota {dimensions = array<i32: 2>} : vector<1x8x8xi32>
    %16 = arith.cmpi sle, %15, %14 : vector<1x8x8xi32>
    %cst_10 = arith.constant 0.000000e+00 : f32
    %17 = vector.broadcast %cst_10 : f32 to vector<16x128xf32>
    %18 = vector.extract_strided_slice %11 {offsets = [0, 0, 0], sizes = [2, 8, 8], strides = [1, 1, 1]} : vector<2x8x32xbf16> to vector<2x8x8xbf16>
    %19 = vector.extract_strided_slice %12 {offsets = [0, 0, 0], sizes = [2, 8, 8], strides = [1, 1, 1]} : vector<2x8x32xbf16> to vector<2x8x8xbf16>
    %20 = vector.extract_strided_slice %13 {offsets = [0, 0, 0], sizes = [2, 8, 8], strides = [1, 1, 1]} : vector<2x8x32xbf16> to vector<2x8x8xbf16>
    "tpu.trace_start"() <{level = 10 : i32, message = "bqd,bkd->bqk"}> : () -> ()
    %cst_11 = arith.constant dense<0.000000e+00> : vector<2x8x8xf32>
    %21 = tpu.matmul %18, %19, %cst_11 {dimension_numbers = #tpu.dot_dimension_numbers<[2], [2], [1], [1], [0, 0, 0, 1, 1, 1], [0], [0]>} : vector<2x8x8xbf16>, vector<2x8x8xbf16>, vector<2x8x8xf32> -> vector<2x8x8xf32>
    %cst_12 = arith.constant 0xFF800000 : f32
    "tpu.trace_stop"() : () -> ()
    %22 = vector.shape_cast %16 : vector<1x8x8xi1> to vector<1x8x8xi1>
    %23 = vector.broadcast %22 : vector<1x8x8xi1> to vector<2x8x8xi1>
    %24 = vector.broadcast %cst_12 : f32 to vector<2x8x8xf32>
    %25 = arith.select %23, %21, %24 : vector<2x8x8xi1>, vector<2x8x8xf32>
    %cst_13 = arith.constant dense<0xFF800000> : vector<2x8xf32>
    %26 = vector.multi_reduction <maximumf>, %25, %cst_13 [2] : vector<2x8x8xf32> to vector<2x8xf32>
    %27 = vector.shape_cast %26 : vector<2x8xf32> to vector<2x8x1xf32>
    %28 = vector.broadcast %27 : vector<2x8x1xf32> to vector<2x8x8xf32>
    %29 = arith.subf %25, %28 : vector<2x8x8xf32>
    %30 = math.exp %29 : vector<2x8x8xf32>
    %cst_14 = arith.constant dense<0.000000e+00> : vector<2x8xf32>
    %31 = vector.multi_reduction <add>, %30, %cst_14 [2] : vector<2x8x8xf32> to vector<2x8xf32>
    %32 = vector.shape_cast %31 : vector<2x8xf32> to vector<2x8x1xf32>
    %33 = arith.truncf %30 : vector<2x8x8xf32> to vector<2x8x8xbf16>
    "tpu.trace_start"() <{level = 10 : i32, message = "bqk,bkd->bqd"}> : () -> ()
    %cst_15 = arith.constant dense<0.000000e+00> : vector<2x8x8xf32>
    %34 = tpu.matmul %33, %20, %cst_15 {dimension_numbers = #tpu.dot_dimension_numbers<[2], [1], [1], [2], [0, 0, 0, 1, 1, 2], [0], [0]>} : vector<2x8x8xbf16>, vector<2x8x8xbf16>, vector<2x8x8xf32> -> vector<2x8x8xf32>
    "tpu.trace_stop"() : () -> ()
    %35 = tpu.reciprocal %32 {approx = true} : vector<2x8x1xf32> -> vector<2x8x1xf32>
    %36 = vector.broadcast %35 : vector<2x8x1xf32> to vector<2x8x8xf32>
    %37 = arith.mulf %34, %36 : vector<2x8x8xf32>
    %38 = vector.shape_cast %37 : vector<2x8x8xf32> to vector<16x8xf32>
    %39 = arith.truncf %38 : vector<16x8xf32> to vector<16x8xbf16>
    %c0_16 = arith.constant 0 : index
    %c0_17 = arith.constant 0 : index
    %c0_18 = arith.constant 0 : index
    %40 = vector.load %arg5[%c0_16, %c0_17, %c0_18] : memref<4x8x128xbf16, #tpu.memory_space<vmem>>, vector<1x8x128xbf16>
    %41 = vector.shape_cast %40 : vector<1x8x128xbf16> to vector<8x128xbf16>
    %cst_19 = arith.constant dense<0.000000e+00> : vector<16x128xf32>
    %42 = tpu.matmul %39, %41, %cst_19 {dimension_numbers = #tpu.dot_dimension_numbers<[1], [0], [0], [1], [0, 0, 1, 1], [], []>} : vector<16x8xbf16>, vector<8x128xbf16>, vector<16x128xf32> -> vector<16x128xf32>
    %43 = arith.addf %17, %42 : vector<16x128xf32>
    %44 = vector.extract_strided_slice %11 {offsets = [0, 0, 8], sizes = [2, 8, 8], strides = [1, 1, 1]} : vector<2x8x32xbf16> to vector<2x8x8xbf16>
    %45 = vector.extract_strided_slice %12 {offsets = [0, 0, 8], sizes = [2, 8, 8], strides = [1, 1, 1]} : vector<2x8x32xbf16> to vector<2x8x8xbf16>
    %46 = vector.extract_strided_slice %13 {offsets = [0, 0, 8], sizes = [2, 8, 8], strides = [1, 1, 1]} : vector<2x8x32xbf16> to vector<2x8x8xbf16>
    "tpu.trace_start"() <{level = 10 : i32, message = "bqd,bkd->bqk"}> : () -> ()
    %cst_20 = arith.constant dense<0.000000e+00> : vector<2x8x8xf32>
    %47 = tpu.matmul %44, %45, %cst_20 {dimension_numbers = #tpu.dot_dimension_numbers<[2], [2], [1], [1], [0, 0, 0, 1, 1, 1], [0], [0]>} : vector<2x8x8xbf16>, vector<2x8x8xbf16>, vector<2x8x8xf32> -> vector<2x8x8xf32>
    %cst_21 = arith.constant 0xFF800000 : f32
    "tpu.trace_stop"() : () -> ()
    %48 = vector.shape_cast %16 : vector<1x8x8xi1> to vector<1x8x8xi1>
    %49 = vector.broadcast %48 : vector<1x8x8xi1> to vector<2x8x8xi1>
    %50 = vector.broadcast %cst_21 : f32 to vector<2x8x8xf32>
    %51 = arith.select %49, %47, %50 : vector<2x8x8xi1>, vector<2x8x8xf32>
    %cst_22 = arith.constant dense<0xFF800000> : vector<2x8xf32>
    %52 = vector.multi_reduction <maximumf>, %51, %cst_22 [2] : vector<2x8x8xf32> to vector<2x8xf32>
    %53 = vector.shape_cast %52 : vector<2x8xf32> to vector<2x8x1xf32>
    %54 = vector.broadcast %53 : vector<2x8x1xf32> to vector<2x8x8xf32>
    %55 = arith.subf %51, %54 : vector<2x8x8xf32>
    %56 = math.exp %55 : vector<2x8x8xf32>
    %cst_23 = arith.constant dense<0.000000e+00> : vector<2x8xf32>
    %57 = vector.multi_reduction <add>, %56, %cst_23 [2] : vector<2x8x8xf32> to vector<2x8xf32>
    %58 = vector.shape_cast %57 : vector<2x8xf32> to vector<2x8x1xf32>
    %59 = arith.truncf %56 : vector<2x8x8xf32> to vector<2x8x8xbf16>
    "tpu.trace_start"() <{level = 10 : i32, message = "bqk,bkd->bqd"}> : () -> ()
    %cst_24 = arith.constant dense<0.000000e+00> : vector<2x8x8xf32>
    %60 = tpu.matmul %59, %46, %cst_24 {dimension_numbers = #tpu.dot_dimension_numbers<[2], [1], [1], [2], [0, 0, 0, 1, 1, 2], [0], [0]>} : vector<2x8x8xbf16>, vector<2x8x8xbf16>, vector<2x8x8xf32> -> vector<2x8x8xf32>
    "tpu.trace_stop"() : () -> ()
    %61 = tpu.reciprocal %58 {approx = true} : vector<2x8x1xf32> -> vector<2x8x1xf32>
    %62 = vector.broadcast %61 : vector<2x8x1xf32> to vector<2x8x8xf32>
    %63 = arith.mulf %60, %62 : vector<2x8x8xf32>
    %64 = vector.shape_cast %63 : vector<2x8x8xf32> to vector<16x8xf32>
    %65 = arith.truncf %64 : vector<16x8xf32> to vector<16x8xbf16>
    %c1 = arith.constant 1 : index
    %c0_25 = arith.constant 0 : index
    %c0_26 = arith.constant 0 : index
    %66 = vector.load %arg5[%c1, %c0_25, %c0_26] : memref<4x8x128xbf16, #tpu.memory_space<vmem>>, vector<1x8x128xbf16>
    %67 = vector.shape_cast %66 : vector<1x8x128xbf16> to vector<8x128xbf16>
    %cst_27 = arith.constant dense<0.000000e+00> : vector<16x128xf32>
    %68 = tpu.matmul %65, %67, %cst_27 {dimension_numbers = #tpu.dot_dimension_numbers<[1], [0], [0], [1], [0, 0, 1, 1], [], []>} : vector<16x8xbf16>, vector<8x128xbf16>, vector<16x128xf32> -> vector<16x128xf32>
    %69 = arith.addf %43, %68 : vector<16x128xf32>
    %70 = vector.extract_strided_slice %11 {offsets = [0, 0, 16], sizes = [2, 8, 8], strides = [1, 1, 1]} : vector<2x8x32xbf16> to vector<2x8x8xbf16>
    %71 = vector.extract_strided_slice %12 {offsets = [0, 0, 16], sizes = [2, 8, 8], strides = [1, 1, 1]} : vector<2x8x32xbf16> to vector<2x8x8xbf16>
    %72 = vector.extract_strided_slice %13 {offsets = [0, 0, 16], sizes = [2, 8, 8], strides = [1, 1, 1]} : vector<2x8x32xbf16> to vector<2x8x8xbf16>
    "tpu.trace_start"() <{level = 10 : i32, message = "bqd,bkd->bqk"}> : () -> ()
    %cst_28 = arith.constant dense<0.000000e+00> : vector<2x8x8xf32>
    %73 = tpu.matmul %70, %71, %cst_28 {dimension_numbers = #tpu.dot_dimension_numbers<[2], [2], [1], [1], [0, 0, 0, 1, 1, 1], [0], [0]>} : vector<2x8x8xbf16>, vector<2x8x8xbf16>, vector<2x8x8xf32> -> vector<2x8x8xf32>
    %cst_29 = arith.constant 0xFF800000 : f32
    "tpu.trace_stop"() : () -> ()
    %74 = vector.shape_cast %16 : vector<1x8x8xi1> to vector<1x8x8xi1>
    %75 = vector.broadcast %74 : vector<1x8x8xi1> to vector<2x8x8xi1>
    %76 = vector.broadcast %cst_29 : f32 to vector<2x8x8xf32>
    %77 = arith.select %75, %73, %76 : vector<2x8x8xi1>, vector<2x8x8xf32>
    %cst_30 = arith.constant dense<0xFF800000> : vector<2x8xf32>
    %78 = vector.multi_reduction <maximumf>, %77, %cst_30 [2] : vector<2x8x8xf32> to vector<2x8xf32>
    %79 = vector.shape_cast %78 : vector<2x8xf32> to vector<2x8x1xf32>
    %80 = vector.broadcast %79 : vector<2x8x1xf32> to vector<2x8x8xf32>
    %81 = arith.subf %77, %80 : vector<2x8x8xf32>
    %82 = math.exp %81 : vector<2x8x8xf32>
    %cst_31 = arith.constant dense<0.000000e+00> : vector<2x8xf32>
    %83 = vector.multi_reduction <add>, %82, %cst_31 [2] : vector<2x8x8xf32> to vector<2x8xf32>
    %84 = vector.shape_cast %83 : vector<2x8xf32> to vector<2x8x1xf32>
    %85 = arith.truncf %82 : vector<2x8x8xf32> to vector<2x8x8xbf16>
    "tpu.trace_start"() <{level = 10 : i32, message = "bqk,bkd->bqd"}> : () -> ()
    %cst_32 = arith.constant dense<0.000000e+00> : vector<2x8x8xf32>
    %86 = tpu.matmul %85, %72, %cst_32 {dimension_numbers = #tpu.dot_dimension_numbers<[2], [1], [1], [2], [0, 0, 0, 1, 1, 2], [0], [0]>} : vector<2x8x8xbf16>, vector<2x8x8xbf16>, vector<2x8x8xf32> -> vector<2x8x8xf32>
    "tpu.trace_stop"() : () -> ()
    %87 = tpu.reciprocal %84 {approx = true} : vector<2x8x1xf32> -> vector<2x8x1xf32>
    %88 = vector.broadcast %87 : vector<2x8x1xf32> to vector<2x8x8xf32>
    %89 = arith.mulf %86, %88 : vector<2x8x8xf32>
    %90 = vector.shape_cast %89 : vector<2x8x8xf32> to vector<16x8xf32>
    %91 = arith.truncf %90 : vector<16x8xf32> to vector<16x8xbf16>
    %c2 = arith.constant 2 : index
    %c0_33 = arith.constant 0 : index
    %c0_34 = arith.constant 0 : index
    %92 = vector.load %arg5[%c2, %c0_33, %c0_34] : memref<4x8x128xbf16, #tpu.memory_space<vmem>>, vector<1x8x128xbf16>
    %93 = vector.shape_cast %92 : vector<1x8x128xbf16> to vector<8x128xbf16>
    %cst_35 = arith.constant dense<0.000000e+00> : vector<16x128xf32>
    %94 = tpu.matmul %91, %93, %cst_35 {dimension_numbers = #tpu.dot_dimension_numbers<[1], [0], [0], [1], [0, 0, 1, 1], [], []>} : vector<16x8xbf16>, vector<8x128xbf16>, vector<16x128xf32> -> vector<16x128xf32>
    %95 = arith.addf %69, %94 : vector<16x128xf32>
    %96 = vector.extract_strided_slice %11 {offsets = [0, 0, 24], sizes = [2, 8, 8], strides = [1, 1, 1]} : vector<2x8x32xbf16> to vector<2x8x8xbf16>
    %97 = vector.extract_strided_slice %12 {offsets = [0, 0, 24], sizes = [2, 8, 8], strides = [1, 1, 1]} : vector<2x8x32xbf16> to vector<2x8x8xbf16>
    %98 = vector.extract_strided_slice %13 {offsets = [0, 0, 24], sizes = [2, 8, 8], strides = [1, 1, 1]} : vector<2x8x32xbf16> to vector<2x8x8xbf16>
    "tpu.trace_start"() <{level = 10 : i32, message = "bqd,bkd->bqk"}> : () -> ()
    %cst_36 = arith.constant dense<0.000000e+00> : vector<2x8x8xf32>
    %99 = tpu.matmul %96, %97, %cst_36 {dimension_numbers = #tpu.dot_dimension_numbers<[2], [2], [1], [1], [0, 0, 0, 1, 1, 1], [0], [0]>} : vector<2x8x8xbf16>, vector<2x8x8xbf16>, vector<2x8x8xf32> -> vector<2x8x8xf32>
    %cst_37 = arith.constant 0xFF800000 : f32
    "tpu.trace_stop"() : () -> ()
    %100 = vector.shape_cast %16 : vector<1x8x8xi1> to vector<1x8x8xi1>
    %101 = vector.broadcast %100 : vector<1x8x8xi1> to vector<2x8x8xi1>
    %102 = vector.broadcast %cst_37 : f32 to vector<2x8x8xf32>
    %103 = arith.select %101, %99, %102 : vector<2x8x8xi1>, vector<2x8x8xf32>
    %cst_38 = arith.constant dense<0xFF800000> : vector<2x8xf32>
    %104 = vector.multi_reduction <maximumf>, %103, %cst_38 [2] : vector<2x8x8xf32> to vector<2x8xf32>
    %105 = vector.shape_cast %104 : vector<2x8xf32> to vector<2x8x1xf32>
    %106 = vector.broadcast %105 : vector<2x8x1xf32> to vector<2x8x8xf32>
    %107 = arith.subf %103, %106 : vector<2x8x8xf32>
    %108 = math.exp %107 : vector<2x8x8xf32>
    %cst_39 = arith.constant dense<0.000000e+00> : vector<2x8xf32>
    %109 = vector.multi_reduction <add>, %108, %cst_39 [2] : vector<2x8x8xf32> to vector<2x8xf32>
    %110 = vector.shape_cast %109 : vector<2x8xf32> to vector<2x8x1xf32>
    %111 = arith.truncf %108 : vector<2x8x8xf32> to vector<2x8x8xbf16>
    "tpu.trace_start"() <{level = 10 : i32, message = "bqk,bkd->bqd"}> : () -> ()
    %cst_40 = arith.constant dense<0.000000e+00> : vector<2x8x8xf32>
    %112 = tpu.matmul %111, %98, %cst_40 {dimension_numbers = #tpu.dot_dimension_numbers<[2], [1], [1], [2], [0, 0, 0, 1, 1, 2], [0], [0]>} : vector<2x8x8xbf16>, vector<2x8x8xbf16>, vector<2x8x8xf32> -> vector<2x8x8xf32>
    "tpu.trace_stop"() : () -> ()
    %113 = tpu.reciprocal %110 {approx = true} : vector<2x8x1xf32> -> vector<2x8x1xf32>
    %114 = vector.broadcast %113 : vector<2x8x1xf32> to vector<2x8x8xf32>
    %115 = arith.mulf %112, %114 : vector<2x8x8xf32>
    %116 = vector.shape_cast %115 : vector<2x8x8xf32> to vector<16x8xf32>
    %117 = arith.truncf %116 : vector<16x8xf32> to vector<16x8xbf16>
    %c3 = arith.constant 3 : index
    %c0_41 = arith.constant 0 : index
    %c0_42 = arith.constant 0 : index
    %118 = vector.load %arg5[%c3, %c0_41, %c0_42] : memref<4x8x128xbf16, #tpu.memory_space<vmem>>, vector<1x8x128xbf16>
    %119 = vector.shape_cast %118 : vector<1x8x128xbf16> to vector<8x128xbf16>
    %cst_43 = arith.constant dense<0.000000e+00> : vector<16x128xf32>
    %120 = tpu.matmul %117, %119, %cst_43 {dimension_numbers = #tpu.dot_dimension_numbers<[1], [0], [0], [1], [0, 0, 1, 1], [], []>} : vector<16x8xbf16>, vector<8x128xbf16>, vector<16x128xf32> -> vector<16x128xf32>
    %121 = arith.addf %95, %120 : vector<16x128xf32>
    %c0_44 = arith.constant 0 : index
    %c0_45 = arith.constant 0 : index
    %122 = vector.load %arg6[%c0_44, %c0_45] : memref<1x128xf32, #tpu.memory_space<vmem>>, vector<1x128xf32>
    %123 = vector.broadcast %122 : vector<1x128xf32> to vector<16x128xf32>
    %124 = arith.addf %121, %123 : vector<16x128xf32>
    %125 = vector.shape_cast %124 : vector<16x128xf32> to vector<2x8x128xf32>
    %c0_46 = arith.constant 0 : index
    %c0_47 = arith.constant 0 : index
    %c0_48 = arith.constant 0 : index
    %126 = vector.load %arg7[%c0_46, %c0_47, %c0_48] : memref<2x8x128xf32, #tpu.memory_space<vmem>>, vector<2x8x128xf32>
    tpu.vector_store %arg7[%c0_46, %c0_47, %c0_48], %125 {strides = array<i32>} : memref<2x8x128xf32, #tpu.memory_space<vmem>>, vector<2x8x128xf32>,
    return
  }
  func.func @transform_0(%arg0: i32) -> (i32, i32, i32) {
    %c0_i32 = arith.constant 0 : i32
    %c0_i32_0 = arith.constant 0 : i32
    %c0_i32_1 = arith.constant 0 : i32
    return %arg0, %c0_i32, %c0_i32_0 : i32, i32, i32
  }
  func.func @transform_1(%arg0: i32) -> (i32, i32) {
    %c0_i32 = arith.constant 0 : i32
    %c0_i32_0 = arith.constant 0 : i32
    %c0_i32_1 = arith.constant 0 : i32
    return %c0_i32, %c0_i32_0 : i32, i32
  }
  func.func @transform_2(%arg0: i32) -> (i32, i32) {
    %c0_i32 = arith.constant 0 : i32
    %c0_i32_0 = arith.constant 0 : i32
    %c0_i32_1 = arith.constant 0 : i32
    return %c0_i32, %c0_i32_0 : i32, i32
  }
  func.func @transform_3(%arg0: i32) -> (i32, i32) {
    %c0_i32 = arith.constant 0 : i32
    %c0_i32_0 = arith.constant 0 : i32
    %c0_i32_1 = arith.constant 0 : i32
    return %c0_i32, %c0_i32_0 : i32, i32
  }
  func.func @transform_4(%arg0: i32) -> (i32, i32, i32) {
    %c0_i32 = arith.constant 0 : i32
    %c0_i32_0 = arith.constant 0 : i32
    %c0_i32_1 = arith.constant 0 : i32
    %c0_i32_2 = arith.constant 0 : i32
    return %c0_i32, %c0_i32_0, %c0_i32_1 : i32, i32, i32
  }
  func.func @transform_5(%arg0: i32) -> (i32, i32) {
    %c0_i32 = arith.constant 0 : i32
    %c0_i32_0 = arith.constant 0 : i32
    %c0_i32_1 = arith.constant 0 : i32
    return %c0_i32, %c0_i32_0 : i32, i32
  }
  func.func @transform_6(%arg0: i32) -> (i32, i32, i32) {
    %c0_i32 = arith.constant 0 : i32
    %c0_i32_0 = arith.constant 0 : i32
    %c0_i32_1 = arith.constant 0 : i32
    return %arg0, %c0_i32, %c0_i32_0 : i32, i32, i32
  }
}

</mosaic_0001>

<llo_original>
// kernel: tpu_custom_call.1
$region0: #{tpu_custom_call.1}
  #allocation0 [shape = 'u32[]', space=smem, size = 0x4, offset = 0x4, fixed_abs, tag = 'smem constant byte address 0x4 - core index']
  #allocation1 [shape = 'u32[144,128]{1,0:T(1,128)}', space=vmem, size = 0x12000, scoped, tag = 'internal scratch']
  %s0 = inlined_call_operand.hbm [shape: bf16[2,8,32], index: 0, kind: input, shape index: {}]
  %s1 = inlined_call_operand.hbm [shape: bf16[32,32], index: 1, kind: input, shape index: {}]
  %s2 = inlined_call_operand.hbm [shape: bf16[32,32], index: 2, kind: input, shape index: {}]
  %s3 = inlined_call_operand.hbm [shape: bf16[32,32], index: 3, kind: input, shape index: {}]
  %s4 = inlined_call_operand.hbm [shape: bf16[4,8,128], index: 4, kind: input, shape index: {}]
  %s5 = inlined_call_operand.hbm [shape: f32[1,128], index: 5, kind: input, shape index: {}]
  %s6 = inlined_call_operand.hbm [shape: f32[2,8,128], index: 6, kind: output, shape index: {}]
  %s7 = sld [smem:[#allocation0]]
  $region58: #{tpu_custom_call.1} parent=0
    _
  %s9 = ssub.s32 1, %s7
  %s10 = scalar_select 0, %s9, %s7
  $region1: #{tpu_custom_call.1} parent=0
    #allocation2 [shape = 'u8[4096]{0}', space=vmem, size = 0x1000, scoped, tag = 'input window, operand 0, single buffered']
    #allocation3 [shape = 's32[1]{0}', space=sflag, size = 0x4, scoped, tag = 'scoped memory for tpu_custom_call.1']
    #allocation4 [shape = 's32[1]{0}', space=sflag, size = 0x4, scoped, tag = 'scoped memory for tpu_custom_call.1']
    #allocation5 [shape = 'u8[8192]{0}', space=vmem, size = 0x2000, scoped, tag = 'input window, operand 1, single buffered']
    #allocation6 [shape = 's32[1]{0}', space=sflag, size = 0x4, scoped, tag = 'scoped memory for tpu_custom_call.1']
    #allocation7 [shape = 'u8[8192]{0}', space=vmem, size = 0x2000, scoped, tag = 'input window, operand 2, single buffered']
    #allocation8 [shape = 'u8[8192]{0}', space=vmem, size = 0x2000, scoped, tag = 'input window, operand 3, single buffered']
    #allocation9 [shape = 's32[1]{0}', space=sflag, size = 0x4, scoped, tag = 'scoped memory for tpu_custom_call.1']
    #allocation10 [shape = 'u8[8192]{0}', space=vmem, size = 0x2000, scoped, tag = 'input window, operand 4, single buffered']
    #allocation11 [shape = 'u8[512]{0}', space=vmem, size = 0x400, scoped, tag = 'input window, operand 5, single buffered']
    #allocation12 [shape = 's32[1]{0}', space=sflag, size = 0x4, scoped, tag = 'scoped memory for tpu_custom_call.1']
    #allocation13 [shape = 'u8[8192]{0}', space=vmem, size = 0x2000, scoped, tag = 'output window, operand 0, single buffered']
    %11 = vsyncpa [#allocation3], 0
    %12 = vsyncpa [#allocation6], 0
    %13 = vsyncpa [#allocation9], 0
    %14 = vsyncpa [#allocation12], 0
    %15 = vsyncpa [#allocation4], 0
    // Predicated region
    $region2: #{tpu_custom_call.1} parent=1 // pred_check
      _
    $region3: #{tpu_custom_call.1} parent=1 // pred_check_branch
      %17 = sbr.rel (0) target = $region5
    $region4: #{tpu_custom_call.1} parent=1 // pred_region
      %s19 = ssub.s32 128, 128
      %20 = vsyncadd [#allocation3], %s19
      %s21 = sshll.u32 [#allocation2], 4
      %s22 = int_to_ptr.vmem [resolvable:$true] %s21
      %27 = dma.hbm_to_vmem [thread:$0]  %s0, 128, %s22, [#allocation3], 64, 64, 4
    $region5: #{tpu_custom_call.1} parent=1 // pred_fallthru
      _
    // Predicated region
    $region6: #{tpu_custom_call.1} parent=1 // pred_check
      _
    $region7: #{tpu_custom_call.1} parent=1 // pred_check_branch
      %29 = sbr.rel (0) target = $region9
    $region8: #{tpu_custom_call.1} parent=1 // pred_region
      %s31 = ssub.s32 256, 256
      %32 = vsyncadd [#allocation6], %s31
      %s33 = sshll.u32 [#allocation5], 4
      %s34 = int_to_ptr.vmem [resolvable:$true] %s33
      %39 = dma.hbm_to_vmem [thread:$0]  %s1, 256, %s34, [#allocation6], 64, 64, 4
    $region9: #{tpu_custom_call.1} parent=1 // pred_fallthru
      _
    // Predicated region
    $region10: #{tpu_custom_call.1} parent=1 // pred_check
      _
    $region11: #{tpu_custom_call.1} parent=1 // pred_check_branch
      %41 = sbr.rel (0) target = $region13
    $region12: #{tpu_custom_call.1} parent=1 // pred_region
      %s43 = ssub.s32 256, 256
      %44 = vsyncadd [#allocation6], %s43
      %s45 = sshll.u32 [#allocation7], 4
      %s46 = int_to_ptr.vmem [resolvable:$true] %s45
      %51 = dma.hbm_to_vmem [thread:$0]  %s2, 256, %s46, [#allocation6], 64, 64, 4
    $region13: #{tpu_custom_call.1} parent=1 // pred_fallthru
      _
    // Predicated region
    $region14: #{tpu_custom_call.1} parent=1 // pred_check
      _
    $region15: #{tpu_custom_call.1} parent=1 // pred_check_branch
      %53 = sbr.rel (0) target = $region17
    $region16: #{tpu_custom_call.1} parent=1 // pred_region
      %s55 = ssub.s32 256, 256
      %56 = vsyncadd [#allocation9], %s55
      %s57 = sshll.u32 [#allocation8], 4
      %s58 = int_to_ptr.vmem [resolvable:$true] %s57
      %63 = dma.hbm_to_vmem [thread:$0]  %s3, 256, %s58, [#allocation9], 64, 64, 4
    $region17: #{tpu_custom_call.1} parent=1 // pred_fallthru
      _
    // Predicated region
    $region18: #{tpu_custom_call.1} parent=1 // pred_check
      _
    $region19: #{tpu_custom_call.1} parent=1 // pred_check_branch
      %65 = sbr.rel (0) target = $region21
    $region20: #{tpu_custom_call.1} parent=1 // pred_region
      %s67 = ssub.s32 256, 256
      %68 = vsyncadd [#allocation9], %s67
      %s69 = sshll.u32 [#allocation10], 4
      %s70 = int_to_ptr.vmem [resolvable:$true] %s69
      %75 = dma.hbm_to_vmem [thread:$0]  %s4, 256, %s70, [#allocation9], 64, 64, 4
    $region21: #{tpu_custom_call.1} parent=1 // pred_fallthru
      _
    // Predicated region
    $region22: #{tpu_custom_call.1} parent=1 // pred_check
      _
    $region23: #{tpu_custom_call.1} parent=1 // pred_check_branch
      %77 = sbr.rel (0) target = $region25
    $region24: #{tpu_custom_call.1} parent=1 // pred_region
      %s79 = ssub.s32 16, 16
      %80 = vsyncadd [#allocation12], %s79
      %s82 = sshll.u32 [#allocation11], 4
      %s83 = int_to_ptr.vmem [resolvable:$true] %s82
      %85 = dma.hbm_to_vmem [thread:$0]  %s5, 16, %s83, [#allocation12]
    $region25: #{tpu_custom_call.1} parent=1 // pred_fallthru
      _
    // Predicated region
    $region26: #{tpu_custom_call.1} parent=1 // pred_check
      _
    $region27: #{tpu_custom_call.1} parent=1 // pred_check_branch
      %87 = sbr.rel (0) target = $region29
    $region28: #{tpu_custom_call.1} parent=1 // pred_region
      %88 = dma.done [#allocation3], 128
    $region29: #{tpu_custom_call.1} parent=1 // pred_fallthru
      _
    // Predicated region
    $region30: #{tpu_custom_call.1} parent=1 // pred_check
      _
    $region31: #{tpu_custom_call.1} parent=1 // pred_check_branch
      %90 = sbr.rel (0) target = $region33
    $region32: #{tpu_custom_call.1} parent=1 // pred_region
      %91 = dma.done [#allocation6], 256
    $region33: #{tpu_custom_call.1} parent=1 // pred_fallthru
      _
    // Predicated region
    $region34: #{tpu_custom_call.1} parent=1 // pred_check
      _
    $region35: #{tpu_custom_call.1} parent=1 // pred_check_branch
      %93 = sbr.rel (0) target = $region37
    $region36: #{tpu_custom_call.1} parent=1 // pred_region
      %94 = dma.done [#allocation6], 256
    $region37: #{tpu_custom_call.1} parent=1 // pred_fallthru
      _
    // Predicated region
    $region38: #{tpu_custom_call.1} parent=1 // pred_check
      _
    $region39: #{tpu_custom_call.1} parent=1 // pred_check_branch
      %96 = sbr.rel (0) target = $region41
    $region40: #{tpu_custom_call.1} parent=1 // pred_region
      %97 = dma.done [#allocation9], 256
    $region41: #{tpu_custom_call.1} parent=1 // pred_fallthru
      _
    // Predicated region
    $region42: #{tpu_custom_call.1} parent=1 // pred_check
      _
    $region43: #{tpu_custom_call.1} parent=1 // pred_check_branch
      %99 = sbr.rel (0) target = $region45
    $region44: #{tpu_custom_call.1} parent=1 // pred_region
      %100 = dma.done [#allocation9], 256
    $region45: #{tpu_custom_call.1} parent=1 // pred_fallthru
      _
    // Predicated region
    $region46: #{tpu_custom_call.1} parent=1 // pred_check
      _
    $region47: #{tpu_custom_call.1} parent=1 // pred_check_branch
      %102 = sbr.rel (0) target = $region49
    $region48: #{tpu_custom_call.1} parent=1 // pred_region
      %103 = dma.done [#allocation12], 16
    $region49: #{tpu_custom_call.1} parent=1 // pred_fallthru
      _
    %v105 = vld [vmem:[#allocation2] sm:$0xf]
    %v106 = vld [vmem:[#allocation2 + $0x4] sm:$0xf]
    %v107 = vld [vmem:[#allocation5] sm:$0xf]
    %v108 = vld [vmem:[#allocation5 + $0x4] sm:$0xf]
    %v109 = vld [vmem:[#allocation5 + $0x8] sm:$0xf]
    %v110 = vld [vmem:[#allocation5 + $0xc] sm:$0xf]
    %v113 = vunpack.c.l.b16 %v105
    %v114 = vunpack.c.l.b16 %v106
    %v115 = vpack.c.b16 %v114, %v113
    %v120 = vunpack.c.l.b16 %v107
    %v121 = vunpack.c.l.b16 %v108
    %v122 = vunpack.c.l.b16 %v109
    %v123 = vunpack.c.l.b16 %v110
    %v124 = vpack.c.b16 %v121, %v120
    %v125 = vpack.c.b16 %v123, %v122
    %vm128 = vcmask 261120
    %v130 = vsel %vm128, %v115, 0
    %132 = vmatprep.subr.bf16.mxu0 0
    %133 = vmatpush1.bf16.msra.mxu0 %v124
    %134 = vmatprep.subr.bf16.mxu0 0
    %135 = vmatpush1.bf16.msra.mxu0 %v125
    %136 = vmatprep.subr.bf16.mxu0 0
    %137 = vmatpush1.bf16.msra.mxu0 0
    %138 = vmatprep.subr.bf16.mxu0 0
    %139 = vmatpush1.bf16.msra.mxu0 0
    %140 = vmatprep.subr.bf16.mxu0 0
    %141 = vmatpush1.bf16.msra.mxu0 0
    %142 = vmatprep.subr.bf16.mxu0 0
    %143 = vmatpush1.bf16.msra.mxu0 0
    %144 = vmatprep.subr.bf16.mxu0 0
    %145 = vmatpush1.bf16.msra.mxu0 0
    %146 = vmatprep.subr.bf16.mxu0 0
    %147 = vmatpush1.bf16.msra.mxu0 0
    %148 = vmatprep.subr.bf16.mxu0 0
    %149 = vmatpush1.bf16.msra.mxu0 0
    %150 = vmatprep.subr.bf16.mxu0 0
    %151 = vmatpush1.bf16.msra.mxu0 0
    %152 = vmatprep.subr.bf16.mxu0 0
    %153 = vmatpush1.bf16.msra.mxu0 0
    %154 = vmatprep.subr.bf16.mxu0 0
    %155 = vmatpush1.bf16.msra.mxu0 0
    %156 = vmatprep.subr.bf16.mxu0 0
    %157 = vmatpush1.bf16.msra.mxu0 0
    %158 = vmatprep.subr.bf16.mxu0 0
    %159 = vmatpush1.bf16.msra.mxu0 0
    %160 = vmatprep.subr.bf16.mxu0 0
    %161 = vmatpush1.bf16.msra.mxu0 0
    %162 = vmatprep.subr.bf16.mxu0 0
    %163 = vmatpush1.bf16.msra.mxu0 0
    %164 = vmatprep.mubr.bf16.mxu0 0
    %165 = vmatmul.mubr.bf16.gmra.mrb[0].mxu0 %v130
    %v166 = vpop.f32.mrb[0].mxu0
    %v167 = vadd.f32 0.0, %v166
    %v168 = vpop.f32.mrb[0].mxu0
    %v169 = vpop.f32.mrb[0].mxu0
    %v170 = vadd.f32 0.0, %v169
    %v171 = vpop.f32.mrb[0].mxu0
    %172 = vdwg.mxu0
    %v173 = vpack.c.bf16 %v170, %v167
    %v174 = vld [vmem:[#allocation7] sm:$0xf]
    %v175 = vld [vmem:[#allocation7 + $0x4] sm:$0xf]
    %v176 = vld [vmem:[#allocation7 + $0x8] sm:$0xf]
    %v177 = vld [vmem:[#allocation7 + $0xc] sm:$0xf]
    %v182 = vunpack.c.l.b16 %v174
    %v183 = vunpack.c.l.b16 %v175
    %v184 = vunpack.c.l.b16 %v176
    %v185 = vunpack.c.l.b16 %v177
    %v186 = vpack.c.b16 %v183, %v182
    %v187 = vpack.c.b16 %v185, %v184
    %190 = vmatprep.subr.bf16.mxu0 0
    %191 = vmatpush1.bf16.msra.mxu0 %v186
    %192 = vmatprep.subr.bf16.mxu0 0
    %193 = vmatpush1.bf16.msra.mxu0 %v187
    %194 = vmatprep.subr.bf16.mxu0 0
    %195 = vmatpush1.bf16.msra.mxu0 0
    %196 = vmatprep.subr.bf16.mxu0 0
    %197 = vmatpush1.bf16.msra.mxu0 0
    %198 = vmatprep.subr.bf16.mxu0 0
    %199 = vmatpush1.bf16.msra.mxu0 0
    %200 = vmatprep.subr.bf16.mxu0 0
    %201 = vmatpush1.bf16.msra.mxu0 0
    %202 = vmatprep.subr.bf16.mxu0 0
    %203 = vmatpush1.bf16.msra.mxu0 0
    %204 = vmatprep.subr.bf16.mxu0 0
    %205 = vmatpush1.bf16.msra.mxu0 0
    %206 = vmatprep.subr.bf16.mxu0 0
    %207 = vmatpush1.bf16.msra.mxu0 0
    %208 = vmatprep.subr.bf16.mxu0 0
    %209 = vmatpush1.bf16.msra.mxu0 0
    %210 = vmatprep.subr.bf16.mxu0 0
    %211 = vmatpush1.bf16.msra.mxu0 0
    %212 = vmatprep.subr.bf16.mxu0 0
    %213 = vmatpush1.bf16.msra.mxu0 0
    %214 = vmatprep.subr.bf16.mxu0 0
    %215 = vmatpush1.bf16.msra.mxu0 0
    %216 = vmatprep.subr.bf16.mxu0 0
    %217 = vmatpush1.bf16.msra.mxu0 0
    %218 = vmatprep.subr.bf16.mxu0 0
    %219 = vmatpush1.bf16.msra.mxu0 0
    %220 = vmatprep.subr.bf16.mxu0 0
    %221 = vmatpush1.bf16.msra.mxu0 0
    %222 = vmatprep.mubr.bf16.mxu0 0
    %223 = vmatmul.mubr.bf16.gmra.mrb[0].mxu0 %v130
    %v224 = vpop.f32.mrb[0].mxu0
    %v225 = vadd.f32 0.0, %v224
    %v226 = vpop.f32.mrb[0].mxu0
    %v227 = vpop.f32.mrb[0].mxu0
    %v228 = vadd.f32 0.0, %v227
    %v229 = vpop.f32.mrb[0].mxu0
    %230 = vdwg.mxu0
    %v231 = vpack.c.bf16 %v228, %v225
    %v232 = vld [vmem:[#allocation8] sm:$0xf]
    %v233 = vld [vmem:[#allocation8 + $0x4] sm:$0xf]
    %v234 = vld [vmem:[#allocation8 + $0x8] sm:$0xf]
    %v235 = vld [vmem:[#allocation8 + $0xc] sm:$0xf]
    %v240 = vunpack.c.l.b16 %v232
    %v241 = vunpack.c.l.b16 %v233
    %v242 = vunpack.c.l.b16 %v234
    %v243 = vunpack.c.l.b16 %v235
    %v244 = vpack.c.b16 %v241, %v240
    %v245 = vpack.c.b16 %v243, %v242
    %248 = vmatprep.subr.bf16.mxu0 0
    %249 = vmatpush1.bf16.msra.mxu0 %v244
    %250 = vmatprep.subr.bf16.mxu0 0
    %251 = vmatpush1.bf16.msra.mxu0 %v245
    %252 = vmatprep.subr.bf16.mxu0 0
    %253 = vmatpush1.bf16.msra.mxu0 0
    %254 = vmatprep.subr.bf16.mxu0 0
    %255 = vmatpush1.bf16.msra.mxu0 0
    %256 = vmatprep.subr.bf16.mxu0 0
    %257 = vmatpush1.bf16.msra.mxu0 0
    %258 = vmatprep.subr.bf16.mxu0 0
    %259 = vmatpush1.bf16.msra.mxu0 0
    %260 = vmatprep.subr.bf16.mxu0 0
    %261 = vmatpush1.bf16.msra.mxu0 0
    %262 = vmatprep.subr.bf16.mxu0 0
    %263 = vmatpush1.bf16.msra.mxu0 0
    %264 = vmatprep.subr.bf16.mxu0 0
    %265 = vmatpush1.bf16.msra.mxu0 0
    %266 = vmatprep.subr.bf16.mxu0 0
    %267 = vmatpush1.bf16.msra.mxu0 0
    %268 = vmatprep.subr.bf16.mxu0 0
    %269 = vmatpush1.bf16.msra.mxu0 0
    %270 = vmatprep.subr.bf16.mxu0 0
    %271 = vmatpush1.bf16.msra.mxu0 0
    %272 = vmatprep.subr.bf16.mxu0 0
    %273 = vmatpush1.bf16.msra.mxu0 0
    %274 = vmatprep.subr.bf16.mxu0 0
    %275 = vmatpush1.bf16.msra.mxu0 0
    %276 = vmatprep.subr.bf16.mxu0 0
    %277 = vmatpush1.bf16.msra.mxu0 0
    %278 = vmatprep.subr.bf16.mxu0 0
    %279 = vmatpush1.bf16.msra.mxu0 0
    %280 = vmatprep.mubr.bf16.mxu0 0
    %281 = vmatmul.mubr.bf16.gmra.mrb[0].mxu0 %v130
    %v282 = vpop.f32.mrb[0].mxu0
    %v283 = vadd.f32 0.0, %v282
    %v284 = vpop.f32.mrb[0].mxu0
    %v285 = vpop.f32.mrb[0].mxu0
    %v286 = vadd.f32 0.0, %v285
    %v287 = vpop.f32.mrb[0].mxu0
    %288 = vdwg.mxu0
    %v289 = vpack.c.bf16 %v286, %v283
    %v291 = vunpack.c.l.b16 %v173
    %v292 = vunpack.c.h.b16 %v173
    %v293 = vpack.c.b16 %v291, %v291
    %v294 = vpack.c.b16 %v292, %v292
    %v296 = vunpack.c.l.b16 %v231
    %v297 = vunpack.c.h.b16 %v231
    %v298 = vpack.c.b16 %v296, %v296
    %v299 = vpack.c.b16 %v297, %v297
    %v301 = vunpack.c.l.b16 %v289
    %v302 = vunpack.c.h.b16 %v289
    %v303 = vpack.c.b16 %v301, %v301
    %v304 = vpack.c.b16 %v302, %v302
    %v305 = vlaneseq
    %v306 = vshrl.u32 %v305, 7
    %v307 = vlaneseq
    %v308 = vand.u32 %v307, 127
    %vm309 = vcmp.le.s32.totalorder %v308, %v306
    %vm310 = vcmask 64512
    %v312 = vsel %vm310, %v293, 0
    %v315 = vsel %vm310, %v298, 0
    %317 = vmatprep.subr.bf16.mxu0 0
    %318 = vmatpush1.bf16.xpose.msra.mxu0 %v315
    %319 = vmatprep.subr.bf16.mxu0 0
    %320 = vmatpush1.bf16.xpose.msra.mxu0 0
    %321 = vmatprep.subr.bf16.mxu0 0
    %322 = vmatpush1.bf16.xpose.msra.mxu0 0
    %323 = vmatprep.subr.bf16.mxu0 0
    %324 = vmatpush1.bf16.xpose.msra.mxu0 0
    %325 = vmatprep.subr.bf16.mxu0 0
    %326 = vmatpush1.bf16.xpose.msra.mxu0 0
    %327 = vmatprep.subr.bf16.mxu0 0
    %328 = vmatpush1.bf16.xpose.msra.mxu0 0
    %329 = vmatprep.subr.bf16.mxu0 0
    %330 = vmatpush1.bf16.xpose.msra.mxu0 0
    %331 = vmatprep.subr.bf16.mxu0 0
    %332 = vmatpush1.bf16.xpose.msra.mxu0 0
    %333 = vmatprep.subr.bf16.mxu0 0
    %334 = vmatpush1.bf16.xpose.msra.mxu0 0
    %335 = vmatprep.subr.bf16.mxu0 0
    %336 = vmatpush1.bf16.xpose.msra.mxu0 0
    %337 = vmatprep.subr.bf16.mxu0 0
    %338 = vmatpush1.bf16.xpose.msra.mxu0 0
    %339 = vmatprep.subr.bf16.mxu0 0
    %340 = vmatpush1.bf16.xpose.msra.mxu0 0
    %341 = vmatprep.subr.bf16.mxu0 0
    %342 = vmatpush1.bf16.xpose.msra.mxu0 0
    %343 = vmatprep.subr.bf16.mxu0 0
    %344 = vmatpush1.bf16.xpose.msra.mxu0 0
    %345 = vmatprep.subr.bf16.mxu0 0
    %346 = vmatpush1.bf16.xpose.msra.mxu0 0
    %347 = vmatprep.subr.bf16.mxu0 0
    %348 = vmatpush1.bf16.xpose.msra.mxu0 0
    %349 = vmatprep.mubr.bf16.mxu0 0
    %350 = vmatmul.mubr.bf16.gmra.mrb[0].mxu0 %v312
    %v351 = vpop.f32.mrb[0].mxu0
    %v352 = vadd.f32 0.0, %v351
    %v353 = vpop.f32.mrb[0].mxu0
    %v354 = vpop.f32.mrb[0].mxu0
    %v355 = vpop.f32.mrb[0].mxu0
    %356 = vdwg.mxu0
    %v358 = vsel %vm310, %v294, 0
    %v361 = vsel %vm310, %v299, 0
    %363 = vmatprep.subr.bf16.mxu0 0
    %364 = vmatpush1.bf16.xpose.msra.mxu0 %v361
    %365 = vmatprep.subr.bf16.mxu0 0
    %366 = vmatpush1.bf16.xpose.msra.mxu0 0
    %367 = vmatprep.subr.bf16.mxu0 0
    %368 = vmatpush1.bf16.xpose.msra.mxu0 0
    %369 = vmatprep.subr.bf16.mxu0 0
    %370 = vmatpush1.bf16.xpose.msra.mxu0 0
    %371 = vmatprep.subr.bf16.mxu0 0
    %372 = vmatpush1.bf16.xpose.msra.mxu0 0
    %373 = vmatprep.subr.bf16.mxu0 0
    %374 = vmatpush1.bf16.xpose.msra.mxu0 0
    %375 = vmatprep.subr.bf16.mxu0 0
    %376 = vmatpush1.bf16.xpose.msra.mxu0 0
    %377 = vmatprep.subr.bf16.mxu0 0
    %378 = vmatpush1.bf16.xpose.msra.mxu0 0
    %379 = vmatprep.subr.bf16.mxu0 0
    %380 = vmatpush1.bf16.xpose.msra.mxu0 0
    %381 = vmatprep.subr.bf16.mxu0 0
    %382 = vmatpush1.bf16.xpose.msra.mxu0 0
    %383 = vmatprep.subr.bf16.mxu0 0
    %384 = vmatpush1.bf16.xpose.msra.mxu0 0
    %385 = vmatprep.subr.bf16.mxu0 0
    %386 = vmatpush1.bf16.xpose.msra.mxu0 0
    %387 = vmatprep.subr.bf16.mxu0 0
    %388 = vmatpush1.bf16.xpose.msra.mxu0 0
    %389 = vmatprep.subr.bf16.mxu0 0
    %390 = vmatpush1.bf16.xpose.msra.mxu0 0
    %391 = vmatprep.subr.bf16.mxu0 0
    %392 = vmatpush1.bf16.xpose.msra.mxu0 0
    %393 = vmatprep.subr.bf16.mxu0 0
    %394 = vmatpush1.bf16.xpose.msra.mxu0 0
    %395 = vmatprep.mubr.bf16.mxu0 0
    %396 = vmatmul.mubr.bf16.gmra.mrb[0].mxu0 %v358
    %v397 = vpop.f32.mrb[0].mxu0
    %v398 = vadd.f32 0.0, %v397
    %v399 = vpop.f32.mrb[0].mxu0
    %v400 = vpop.f32.mrb[0].mxu0
    %v401 = vpop.f32.mrb[0].mxu0
    %402 = vdwg.mxu0
    %v403 = vsel %vm309, 1, 0
    %vm404 = vcmp.eq.s32.totalorder %v403, 1
    %v405 = vsel %vm404, %v352, -inf
    %v406 = vsel %vm404, %v398, -inf
    %v407 = vsel %vm310, %v405, -inf
    %408 = vmax.xlane.f32.xlu0 %v407
    %v409 = vpop.xlane.xlu0 %408
    %v410 = vsel %vm310, %v406, -inf
    %411 = vmax.xlane.f32.xlu0 %v410
    %v412 = vpop.xlane.xlu0 %411
    %v413 = vsub.f32 %v405, %v409
    %v414 = vsub.f32 %v406, %v412
    %v415 = vmul.f32 %v413, 1.442695
    %v416 = vpow.pop %v415
    %v417 = vmul.f32 %v414, 1.442695
    %v418 = vpow.pop %v417
    %v419 = vsel %vm310, %v416, 0.0
    %420 = vadd.xlane.f32.xlu0 %v419
    %v421 = vpop.xlane.xlu0 %420
    %v422 = vsel %vm310, %v418, 0.0
    %423 = vadd.xlane.f32.xlu0 %v422
    %v424 = vpop.xlane.xlu0 %423
    %v425 = vpack.c.bf16 %v416, %v416
    %v426 = vpack.c.bf16 %v418, %v418
    %v428 = vsel %vm310, %v425, 0
    %vm430 = vcmask 1043456
    %v432 = vsel %vm430, %v303, 0
    %434 = vmatprep.subr.bf16.mxu0 0
    %435 = vmatpush1.bf16.msra.mxu0 %v432
    %436 = vmatprep.subr.bf16.mxu0 0
    %437 = vmatpush1.bf16.msra.mxu0 0
    %438 = vmatprep.subr.bf16.mxu0 0
    %439 = vmatpush1.bf16.msra.mxu0 0
    %440 = vmatprep.subr.bf16.mxu0 0
    %441 = vmatpush1.bf16.msra.mxu0 0
    %442 = vmatprep.subr.bf16.mxu0 0
    %443 = vmatpush1.bf16.msra.mxu0 0
    %444 = vmatprep.subr.bf16.mxu0 0
    %445 = vmatpush1.bf16.msra.mxu0 0
    %446 = vmatprep.subr.bf16.mxu0 0
    %447 = vmatpush1.bf16.msra.mxu0 0
    %448 = vmatprep.subr.bf16.mxu0 0
    %449 = vmatpush1.bf16.msra.mxu0 0
    %450 = vmatprep.subr.bf16.mxu0 0
    %451 = vmatpush1.bf16.msra.mxu0 0
    %452 = vmatprep.subr.bf16.mxu0 0
    %453 = vmatpush1.bf16.msra.mxu0 0
    %454 = vmatprep.subr.bf16.mxu0 0
    %455 = vmatpush1.bf16.msra.mxu0 0
    %456 = vmatprep.subr.bf16.mxu0 0
    %457 = vmatpush1.bf16.msra.mxu0 0
    %458 = vmatprep.subr.bf16.mxu0 0
    %459 = vmatpush1.bf16.msra.mxu0 0
    %460 = vmatprep.subr.bf16.mxu0 0
    %461 = vmatpush1.bf16.msra.mxu0 0
    %462 = vmatprep.subr.bf16.mxu0 0
    %463 = vmatpush1.bf16.msra.mxu0 0
    %464 = vmatprep.subr.bf16.mxu0 0
    %465 = vmatpush1.bf16.msra.mxu0 0
    %466 = vmatprep.mubr.bf16.mxu0 0
    %467 = vmatmul.mubr.bf16.gmra.mrb[0].mxu0 %v428
    %v468 = vpop.f32.mrb[0].mxu0
    %v469 = vadd.f32 0.0, %v468
    %v470 = vpop.f32.mrb[0].mxu0
    %v471 = vpop.f32.mrb[0].mxu0
    %v472 = vpop.f32.mrb[0].mxu0
    %473 = vdwg.mxu0
    %v475 = vsel %vm310, %v426, 0
    %v478 = vsel %vm430, %v304, 0
    %480 = vmatprep.subr.bf16.mxu0 0
    %481 = vmatpush1.bf16.msra.mxu0 %v478
    %482 = vmatprep.subr.bf16.mxu0 0
    %483 = vmatpush1.bf16.msra.mxu0 0
    %484 = vmatprep.subr.bf16.mxu0 0
    %485 = vmatpush1.bf16.msra.mxu0 0
    %486 = vmatprep.subr.bf16.mxu0 0
    %487 = vmatpush1.bf16.msra.mxu0 0
    %488 = vmatprep.subr.bf16.mxu0 0
    %489 = vmatpush1.bf16.msra.mxu0 0
    %490 = vmatprep.subr.bf16.mxu0 0
    %491 = vmatpush1.bf16.msra.mxu0 0
    %492 = vmatprep.subr.bf16.mxu0 0
    %493 = vmatpush1.bf16.msra.mxu0 0
    %494 = vmatprep.subr.bf16.mxu0 0
    %495 = vmatpush1.bf16.msra.mxu0 0
    %496 = vmatprep.subr.bf16.mxu0 0
    %497 = vmatpush1.bf16.msra.mxu0 0
    %498 = vmatprep.subr.bf16.mxu0 0
    %499 = vmatpush1.bf16.msra.mxu0 0
    %500 = vmatprep.subr.bf16.mxu0 0
    %501 = vmatpush1.bf16.msra.mxu0 0
    %502 = vmatprep.subr.bf16.mxu0 0
    %503 = vmatpush1.bf16.msra.mxu0 0
    %504 = vmatprep.subr.bf16.mxu0 0
    %505 = vmatpush1.bf16.msra.mxu0 0
    %506 = vmatprep.subr.bf16.mxu0 0
    %507 = vmatpush1.bf16.msra.mxu0 0
    %508 = vmatprep.subr.bf16.mxu0 0
    %509 = vmatpush1.bf16.msra.mxu0 0
    %510 = vmatprep.subr.bf16.mxu0 0
    %511 = vmatpush1.bf16.msra.mxu0 0
    %512 = vmatprep.mubr.bf16.mxu0 0
    %513 = vmatmul.mubr.bf16.gmra.mrb[0].mxu0 %v475
    %v514 = vpop.f32.mrb[0].mxu0
    %v515 = vadd.f32 0.0, %v514
    %v516 = vpop.f32.mrb[0].mxu0
    %v517 = vpop.f32.mrb[0].mxu0
    %v518 = vpop.f32.mrb[0].mxu0
    %519 = vdwg.mxu0
    %v520 = vrcp.pop %v421
    %v521 = vrcp.pop %v424
    %v522 = vmul.f32 %v469, %v520
    %v523 = vmul.f32 %v515, %v521
    %v524 = vpack.c.bf16 %v523, %v522
    %v525 = vld [vmem:[#allocation10] sm:$0xf]
    %526 = vrot.lane.b32.xlu0 %v293, 120
    %v527 = vpop.permute.xlu0 %526
    %528 = vrot.lane.b32.xlu0 %v298, 120
    %v529 = vpop.permute.xlu0 %528
    %v531 = vsel %vm310, %v527, 0
    %v534 = vsel %vm310, %v529, 0
    %536 = vmatprep.subr.bf16.mxu0 0
    %537 = vmatpush1.bf16.xpose.msra.mxu0 %v534
    %538 = vmatprep.subr.bf16.mxu0 0
    %539 = vmatpush1.bf16.xpose.msra.mxu0 0
    %540 = vmatprep.subr.bf16.mxu0 0
    %541 = vmatpush1.bf16.xpose.msra.mxu0 0
    %542 = vmatprep.subr.bf16.mxu0 0
    %543 = vmatpush1.bf16.xpose.msra.mxu0 0
    %544 = vmatprep.subr.bf16.mxu0 0
    %545 = vmatpush1.bf16.xpose.msra.mxu0 0
    %546 = vmatprep.subr.bf16.mxu0 0
    %547 = vmatpush1.bf16.xpose.msra.mxu0 0
    %548 = vmatprep.subr.bf16.mxu0 0
    %549 = vmatpush1.bf16.xpose.msra.mxu0 0
    %550 = vmatprep.subr.bf16.mxu0 0
    %551 = vmatpush1.bf16.xpose.msra.mxu0 0
    %552 = vmatprep.subr.bf16.mxu0 0
    %553 = vmatpush1.bf16.xpose.msra.mxu0 0
    %554 = vmatprep.subr.bf16.mxu0 0
    %555 = vmatpush1.bf16.xpose.msra.mxu0 0
    %556 = vmatprep.subr.bf16.mxu0 0
    %557 = vmatpush1.bf16.xpose.msra.mxu0 0
    %558 = vmatprep.subr.bf16.mxu0 0
    %559 = vmatpush1.bf16.xpose.msra.mxu0 0
    %560 = vmatprep.subr.bf16.mxu0 0
    %561 = vmatpush1.bf16.xpose.msra.mxu0 0
    %562 = vmatprep.subr.bf16.mxu0 0
    %563 = vmatpush1.bf16.xpose.msra.mxu0 0
    %564 = vmatprep.subr.bf16.mxu0 0
    %565 = vmatpush1.bf16.xpose.msra.mxu0 0
    %566 = vmatprep.subr.bf16.mxu0 0
    %567 = vmatpush1.bf16.xpose.msra.mxu0 0
    %568 = vmatprep.mubr.bf16.mxu0 0
    %569 = vmatmul.mubr.bf16.gmra.mrb[0].mxu0 %v531
    %v570 = vpop.f32.mrb[0].mxu0
    %v571 = vadd.f32 0.0, %v570
    %v572 = vpop.f32.mrb[0].mxu0
    %v573 = vpop.f32.mrb[0].mxu0
    %v574 = vpop.f32.mrb[0].mxu0
    %575 = vdwg.mxu0
    %576 = vrot.lane.b32.xlu0 %v294, 120
    %v577 = vpop.permute.xlu0 %576
    %578 = vrot.lane.b32.xlu0 %v299, 120
    %v579 = vpop.permute.xlu0 %578
    %v581 = vsel %vm310, %v577, 0
    %v584 = vsel %vm310, %v579, 0
    %586 = vmatprep.subr.bf16.mxu0 0
    %587 = vmatpush1.bf16.xpose.msra.mxu0 %v584
    %588 = vmatprep.subr.bf16.mxu0 0
    %589 = vmatpush1.bf16.xpose.msra.mxu0 0
    %590 = vmatprep.subr.bf16.mxu0 0
    %591 = vmatpush1.bf16.xpose.msra.mxu0 0
    %592 = vmatprep.subr.bf16.mxu0 0
    %593 = vmatpush1.bf16.xpose.msra.mxu0 0
    %594 = vmatprep.subr.bf16.mxu0 0
    %595 = vmatpush1.bf16.xpose.msra.mxu0 0
    %596 = vmatprep.subr.bf16.mxu0 0
    %597 = vmatpush1.bf16.xpose.msra.mxu0 0
    %598 = vmatprep.subr.bf16.mxu0 0
    %599 = vmatpush1.bf16.xpose.msra.mxu0 0
    %600 = vmatprep.subr.bf16.mxu0 0
    %601 = vmatpush1.bf16.xpose.msra.mxu0 0
    %602 = vmatprep.subr.bf16.mxu0 0
    %603 = vmatpush1.bf16.xpose.msra.mxu0 0
    %604 = vmatprep.subr.bf16.mxu0 0
    %605 = vmatpush1.bf16.xpose.msra.mxu0 0
    %606 = vmatprep.subr.bf16.mxu0 0
    %607 = vmatpush1.bf16.xpose.msra.mxu0 0
    %608 = vmatprep.subr.bf16.mxu0 0
    %609 = vmatpush1.bf16.xpose.msra.mxu0 0
    %610 = vmatprep.subr.bf16.mxu0 0
    %611 = vmatpush1.bf16.xpose.msra.mxu0 0
    %612 = vmatprep.subr.bf16.mxu0 0
    %613 = vmatpush1.bf16.xpose.msra.mxu0 0
    %614 = vmatprep.subr.bf16.mxu0 0
    %615 = vmatpush1.bf16.xpose.msra.mxu0 0
    %616 = vmatprep.subr.bf16.mxu0 0
    %617 = vmatpush1.bf16.xpose.msra.mxu0 0
    %618 = vmatprep.mubr.bf16.mxu0 0
    %619 = vmatmul.mubr.bf16.gmra.mrb[0].mxu0 %v581
    %v620 = vpop.f32.mrb[0].mxu0
    %v621 = vadd.f32 0.0, %v620
    %v622 = vpop.f32.mrb[0].mxu0
    %v623 = vpop.f32.mrb[0].mxu0
    %v624 = vpop.f32.mrb[0].mxu0
    %625 = vdwg.mxu0
    %v626 = vsel %vm404, %v571, -inf
    %v627 = vsel %vm404, %v621, -inf
    %v628 = vsel %vm310, %v626, -inf
    %629 = vmax.xlane.f32.xlu0 %v628
    %v630 = vpop.xlane.xlu0 %629
    %v631 = vsel %vm310, %v627, -inf
    %632 = vmax.xlane.f32.xlu0 %v631
    %v633 = vpop.xlane.xlu0 %632
    %v634 = vsub.f32 %v626, %v630
    %v635 = vsub.f32 %v627, %v633
    %v636 = vmul.f32 %v634, 1.442695
    %v637 = vpow.pop %v636
    %v638 = vmul.f32 %v635, 1.442695
    %v639 = vpow.pop %v638
    %v640 = vsel %vm310, %v637, 0.0
    %641 = vadd.xlane.f32.xlu0 %v640
    %v642 = vpop.xlane.xlu0 %641
    %v643 = vsel %vm310, %v639, 0.0
    %644 = vadd.xlane.f32.xlu0 %v643
    %v645 = vpop.xlane.xlu0 %644
    %v646 = vpack.c.bf16 %v637, %v637
    %v647 = vpack.c.bf16 %v639, %v639
    %648 = vrot.lane.b32.xlu0 %v303, 120
    %v649 = vpop.permute.xlu0 %648
    %v651 = vsel %vm310, %v646, 0
    %v654 = vsel %vm430, %v649, 0
    %656 = vmatprep.subr.bf16.mxu0 0
    %657 = vmatpush1.bf16.msra.mxu0 %v654
    %658 = vmatprep.subr.bf16.mxu0 0
    %659 = vmatpush1.bf16.msra.mxu0 0
    %660 = vmatprep.subr.bf16.mxu0 0
    %661 = vmatpush1.bf16.msra.mxu0 0
    %662 = vmatprep.subr.bf16.mxu0 0
    %663 = vmatpush1.bf16.msra.mxu0 0
    %664 = vmatprep.subr.bf16.mxu0 0
    %665 = vmatpush1.bf16.msra.mxu0 0
    %666 = vmatprep.subr.bf16.mxu0 0
    %667 = vmatpush1.bf16.msra.mxu0 0
    %668 = vmatprep.subr.bf16.mxu0 0
    %669 = vmatpush1.bf16.msra.mxu0 0
    %670 = vmatprep.subr.bf16.mxu0 0
    %671 = vmatpush1.bf16.msra.mxu0 0
    %672 = vmatprep.subr.bf16.mxu0 0
    %673 = vmatpush1.bf16.msra.mxu0 0
    %674 = vmatprep.subr.bf16.mxu0 0
    %675 = vmatpush1.bf16.msra.mxu0 0
    %676 = vmatprep.subr.bf16.mxu0 0
    %677 = vmatpush1.bf16.msra.mxu0 0
    %678 = vmatprep.subr.bf16.mxu0 0
    %679 = vmatpush1.bf16.msra.mxu0 0
    %680 = vmatprep.subr.bf16.mxu0 0
    %681 = vmatpush1.bf16.msra.mxu0 0
    %682 = vmatprep.subr.bf16.mxu0 0
    %683 = vmatpush1.bf16.msra.mxu0 0
    %684 = vmatprep.subr.bf16.mxu0 0
    %685 = vmatpush1.bf16.msra.mxu0 0
    %686 = vmatprep.subr.bf16.mxu0 0
    %687 = vmatpush1.bf16.msra.mxu0 0
    %688 = vmatprep.mubr.bf16.mxu0 0
    %689 = vmatmul.mubr.bf16.gmra.mrb[0].mxu0 %v651
    %v690 = vpop.f32.mrb[0].mxu0
    %v691 = vadd.f32 0.0, %v690
    %v692 = vpop.f32.mrb[0].mxu0
    %v693 = vpop.f32.mrb[0].mxu0
    %v694 = vpop.f32.mrb[0].mxu0
    %695 = vdwg.mxu0
    %696 = vrot.lane.b32.xlu0 %v304, 120
    %v697 = vpop.permute.xlu0 %696
    %v699 = vsel %vm310, %v647, 0
    %v702 = vsel %vm430, %v697, 0
    %704 = vmatprep.subr.bf16.mxu0 0
    %705 = vmatpush1.bf16.msra.mxu0 %v702
    %706 = vmatprep.subr.bf16.mxu0 0
    %707 = vmatpush1.bf16.msra.mxu0 0
    %708 = vmatprep.subr.bf16.mxu0 0
    %709 = vmatpush1.bf16.msra.mxu0 0
    %710 = vmatprep.subr.bf16.mxu0 0
    %711 = vmatpush1.bf16.msra.mxu0 0
    %712 = vmatprep.subr.bf16.mxu0 0
    %713 = vmatpush1.bf16.msra.mxu0 0
    %714 = vmatprep.subr.bf16.mxu0 0
    %715 = vmatpush1.bf16.msra.mxu0 0
    %716 = vmatprep.subr.bf16.mxu0 0
    %717 = vmatpush1.bf16.msra.mxu0 0
    %718 = vmatprep.subr.bf16.mxu0 0
    %719 = vmatpush1.bf16.msra.mxu0 0
    %720 = vmatprep.subr.bf16.mxu0 0
    %721 = vmatpush1.bf16.msra.mxu0 0
    %722 = vmatprep.subr.bf16.mxu0 0
    %723 = vmatpush1.bf16.msra.mxu0 0
    %724 = vmatprep.subr.bf16.mxu0 0
    %725 = vmatpush1.bf16.msra.mxu0 0
    %726 = vmatprep.subr.bf16.mxu0 0
    %727 = vmatpush1.bf16.msra.mxu0 0
    %728 = vmatprep.subr.bf16.mxu0 0
    %729 = vmatpush1.bf16.msra.mxu0 0
    %730 = vmatprep.subr.bf16.mxu0 0
    %731 = vmatpush1.bf16.msra.mxu0 0
    %732 = vmatprep.subr.bf16.mxu0 0
    %733 = vmatpush1.bf16.msra.mxu0 0
    %734 = vmatprep.subr.bf16.mxu0 0
    %735 = vmatpush1.bf16.msra.mxu0 0
    %736 = vmatprep.mubr.bf16.mxu0 0
    %737 = vmatmul.mubr.bf16.gmra.mrb[0].mxu0 %v699
    %v738 = vpop.f32.mrb[0].mxu0
    %v739 = vadd.f32 0.0, %v738
    %v740 = vpop.f32.mrb[0].mxu0
    %v741 = vpop.f32.mrb[0].mxu0
    %v742 = vpop.f32.mrb[0].mxu0
    %743 = vdwg.mxu0
    %v744 = vrcp.pop %v642
    %v745 = vrcp.pop %v645
    %v746 = vmul.f32 %v691, %v744
    %v747 = vmul.f32 %v739, %v745
    %v748 = vpack.c.bf16 %v747, %v746
    %s749 = scalar_lea.vmem [#allocation10], 4
    %v750 = vld [vmem:[%s749] sm:$0xf]
    %v752 = vsel %vm310, %v748, 0
    %v755 = vsel %vm430, %v750, 0
    %757 = vmatprep.subr.bf16.mxu0 0
    %758 = vmatpush1.bf16.msra.mxu0 %v755
    %759 = vmatprep.subr.bf16.mxu0 0
    %760 = vmatpush1.bf16.msra.mxu0 0
    %761 = vmatprep.subr.bf16.mxu0 0
    %762 = vmatpush1.bf16.msra.mxu0 0
    %763 = vmatprep.subr.bf16.mxu0 0
    %764 = vmatpush1.bf16.msra.mxu0 0
    %765 = vmatprep.subr.bf16.mxu0 0
    %766 = vmatpush1.bf16.msra.mxu0 0
    %767 = vmatprep.subr.bf16.mxu0 0
    %768 = vmatpush1.bf16.msra.mxu0 0
    %769 = vmatprep.subr.bf16.mxu0 0
    %770 = vmatpush1.bf16.msra.mxu0 0
    %771 = vmatprep.subr.bf16.mxu0 0
    %772 = vmatpush1.bf16.msra.mxu0 0
    %773 = vmatprep.subr.bf16.mxu0 0
    %774 = vmatpush1.bf16.msra.mxu0 0
    %775 = vmatprep.subr.bf16.mxu0 0
    %776 = vmatpush1.bf16.msra.mxu0 0
    %777 = vmatprep.subr.bf16.mxu0 0
    %778 = vmatpush1.bf16.msra.mxu0 0
    %779 = vmatprep.subr.bf16.mxu0 0
    %780 = vmatpush1.bf16.msra.mxu0 0
    %781 = vmatprep.subr.bf16.mxu0 0
    %782 = vmatpush1.bf16.msra.mxu0 0
    %783 = vmatprep.subr.bf16.mxu0 0
    %784 = vmatpush1.bf16.msra.mxu0 0
    %785 = vmatprep.subr.bf16.mxu0 0
    %786 = vmatpush1.bf16.msra.mxu0 0
    %787 = vmatprep.subr.bf16.mxu0 0
    %788 = vmatpush1.bf16.msra.mxu0 0
    %789 = vmatprep.mubr.bf16.mxu0 0
    %790 = vmatmul.mubr.bf16.gmra.mrb[0].mxu0 %v752
    %v791 = vpop.f32.mrb[0].mxu0
    %v792 = vadd.f32 0.0, %v791
    %v793 = vpop.f32.mrb[0].mxu0
    %v794 = vpop.f32.mrb[0].mxu0
    %v795 = vadd.f32 0.0, %v794
    %v796 = vpop.f32.mrb[0].mxu0
    %797 = vdwg.mxu0
    %v799 = vsel %vm310, %v524, 0
    %v802 = vsel %vm430, %v525, 0
    %804 = vmatprep.subr.bf16.mxu0 0
    %805 = vmatpush1.bf16.msra.mxu0 %v802
    %806 = vmatprep.subr.bf16.mxu0 0
    %807 = vmatpush1.bf16.msra.mxu0 0
    %808 = vmatprep.subr.bf16.mxu0 0
    %809 = vmatpush1.bf16.msra.mxu0 0
    %810 = vmatprep.subr.bf16.mxu0 0
    %811 = vmatpush1.bf16.msra.mxu0 0
    %812 = vmatprep.subr.bf16.mxu0 0
    %813 = vmatpush1.bf16.msra.mxu0 0
    %814 = vmatprep.subr.bf16.mxu0 0
    %815 = vmatpush1.bf16.msra.mxu0 0
    %816 = vmatprep.subr.bf16.mxu0 0
    %817 = vmatpush1.bf16.msra.mxu0 0
    %818 = vmatprep.subr.bf16.mxu0 0
    %819 = vmatpush1.bf16.msra.mxu0 0
    %820 = vmatprep.subr.bf16.mxu0 0
    %821 = vmatpush1.bf16.msra.mxu0 0
    %822 = vmatprep.subr.bf16.mxu0 0
    %823 = vmatpush1.bf16.msra.mxu0 0
    %824 = vmatprep.subr.bf16.mxu0 0
    %825 = vmatpush1.bf16.msra.mxu0 0
    %826 = vmatprep.subr.bf16.mxu0 0
    %827 = vmatpush1.bf16.msra.mxu0 0
    %828 = vmatprep.subr.bf16.mxu0 0
    %829 = vmatpush1.bf16.msra.mxu0 0
    %830 = vmatprep.subr.bf16.mxu0 0
    %831 = vmatpush1.bf16.msra.mxu0 0
    %832 = vmatprep.subr.bf16.mxu0 0
    %833 = vmatpush1.bf16.msra.mxu0 0
    %834 = vmatprep.subr.bf16.mxu0 0
    %835 = vmatpush1.bf16.msra.mxu0 0
    %836 = vmatprep.mubr.bf16.mxu0 0
    %837 = vmatmul.mubr.bf16.gmra.mrb[0].mxu0 %v799
    %v838 = vpop.f32.mrb[0].mxu0
    %v839 = vadd.f32 %v792, %v838
    %v840 = vpop.f32.mrb[0].mxu0
    %v841 = vpop.f32.mrb[0].mxu0
    %v842 = vadd.f32 %v795, %v841
    %v843 = vpop.f32.mrb[0].mxu0
    %844 = vdwg.mxu0
    %845 = vrot.lane.b32.xlu0 %v293, 112
    %v846 = vpop.permute.xlu0 %845
    %847 = vrot.lane.b32.xlu0 %v298, 112
    %v848 = vpop.permute.xlu0 %847
    %v850 = vsel %vm310, %v846, 0
    %v853 = vsel %vm310, %v848, 0
    %855 = vmatprep.subr.bf16.mxu0 0
    %856 = vmatpush1.bf16.xpose.msra.mxu0 %v853
    %857 = vmatprep.subr.bf16.mxu0 0
    %858 = vmatpush1.bf16.xpose.msra.mxu0 0
    %859 = vmatprep.subr.bf16.mxu0 0
    %860 = vmatpush1.bf16.xpose.msra.mxu0 0
    %861 = vmatprep.subr.bf16.mxu0 0
    %862 = vmatpush1.bf16.xpose.msra.mxu0 0
    %863 = vmatprep.subr.bf16.mxu0 0
    %864 = vmatpush1.bf16.xpose.msra.mxu0 0
    %865 = vmatprep.subr.bf16.mxu0 0
    %866 = vmatpush1.bf16.xpose.msra.mxu0 0
    %867 = vmatprep.subr.bf16.mxu0 0
    %868 = vmatpush1.bf16.xpose.msra.mxu0 0
    %869 = vmatprep.subr.bf16.mxu0 0
    %870 = vmatpush1.bf16.xpose.msra.mxu0 0
    %871 = vmatprep.subr.bf16.mxu0 0
    %872 = vmatpush1.bf16.xpose.msra.mxu0 0
    %873 = vmatprep.subr.bf16.mxu0 0
    %874 = vmatpush1.bf16.xpose.msra.mxu0 0
    %875 = vmatprep.subr.bf16.mxu0 0
    %876 = vmatpush1.bf16.xpose.msra.mxu0 0
    %877 = vmatprep.subr.bf16.mxu0 0
    %878 = vmatpush1.bf16.xpose.msra.mxu0 0
    %879 = vmatprep.subr.bf16.mxu0 0
    %880 = vmatpush1.bf16.xpose.msra.mxu0 0
    %881 = vmatprep.subr.bf16.mxu0 0
    %882 = vmatpush1.bf16.xpose.msra.mxu0 0
    %883 = vmatprep.subr.bf16.mxu0 0
    %884 = vmatpush1.bf16.xpose.msra.mxu0 0
    %885 = vmatprep.subr.bf16.mxu0 0
    %886 = vmatpush1.bf16.xpose.msra.mxu0 0
    %887 = vmatprep.mubr.bf16.mxu0 0
    %888 = vmatmul.mubr.bf16.gmra.mrb[0].mxu0 %v850
    %v889 = vpop.f32.mrb[0].mxu0
    %v890 = vadd.f32 0.0, %v889
    %v891 = vpop.f32.mrb[0].mxu0
    %v892 = vpop.f32.mrb[0].mxu0
    %v893 = vpop.f32.mrb[0].mxu0
    %894 = vdwg.mxu0
    %895 = vrot.lane.b32.xlu0 %v294, 112
    %v896 = vpop.permute.xlu0 %895
    %897 = vrot.lane.b32.xlu0 %v299, 112
    %v898 = vpop.permute.xlu0 %897
    %v900 = vsel %vm310, %v896, 0
    %v903 = vsel %vm310, %v898, 0
    %905 = vmatprep.subr.bf16.mxu0 0
    %906 = vmatpush1.bf16.xpose.msra.mxu0 %v903
    %907 = vmatprep.subr.bf16.mxu0 0
    %908 = vmatpush1.bf16.xpose.msra.mxu0 0
    %909 = vmatprep.subr.bf16.mxu0 0
    %910 = vmatpush1.bf16.xpose.msra.mxu0 0
    %911 = vmatprep.subr.bf16.mxu0 0
    %912 = vmatpush1.bf16.xpose.msra.mxu0 0
    %913 = vmatprep.subr.bf16.mxu0 0
    %914 = vmatpush1.bf16.xpose.msra.mxu0 0
    %915 = vmatprep.subr.bf16.mxu0 0
    %916 = vmatpush1.bf16.xpose.msra.mxu0 0
    %917 = vmatprep.subr.bf16.mxu0 0
    %918 = vmatpush1.bf16.xpose.msra.mxu0 0
    %919 = vmatprep.subr.bf16.mxu0 0
    %920 = vmatpush1.bf16.xpose.msra.mxu0 0
    %921 = vmatprep.subr.bf16.mxu0 0
    %922 = vmatpush1.bf16.xpose.msra.mxu0 0
    %923 = vmatprep.subr.bf16.mxu0 0
    %924 = vmatpush1.bf16.xpose.msra.mxu0 0
    %925 = vmatprep.subr.bf16.mxu0 0
    %926 = vmatpush1.bf16.xpose.msra.mxu0 0
    %927 = vmatprep.subr.bf16.mxu0 0
    %928 = vmatpush1.bf16.xpose.msra.mxu0 0
    %929 = vmatprep.subr.bf16.mxu0 0
    %930 = vmatpush1.bf16.xpose.msra.mxu0 0
    %931 = vmatprep.subr.bf16.mxu0 0
    %932 = vmatpush1.bf16.xpose.msra.mxu0 0
    %933 = vmatprep.subr.bf16.mxu0 0
    %934 = vmatpush1.bf16.xpose.msra.mxu0 0
    %935 = vmatprep.subr.bf16.mxu0 0
    %936 = vmatpush1.bf16.xpose.msra.mxu0 0
    %937 = vmatprep.mubr.bf16.mxu0 0
    %938 = vmatmul.mubr.bf16.gmra.mrb[0].mxu0 %v900
    %v939 = vpop.f32.mrb[0].mxu0
    %v940 = vadd.f32 0.0, %v939
    %v941 = vpop.f32.mrb[0].mxu0
    %v942 = vpop.f32.mrb[0].mxu0
    %v943 = vpop.f32.mrb[0].mxu0
    %944 = vdwg.mxu0
    %v945 = vsel %vm404, %v890, -inf
    %v946 = vsel %vm404, %v940, -inf
    %v947 = vsel %vm310, %v945, -inf
    %948 = vmax.xlane.f32.xlu0 %v947
    %v949 = vpop.xlane.xlu0 %948
    %v950 = vsel %vm310, %v946, -inf
    %951 = vmax.xlane.f32.xlu0 %v950
    %v952 = vpop.xlane.xlu0 %951
    %v953 = vsub.f32 %v945, %v949
    %v954 = vsub.f32 %v946, %v952
    %v955 = vmul.f32 %v953, 1.442695
    %v956 = vpow.pop %v955
    %v957 = vmul.f32 %v954, 1.442695
    %v958 = vpow.pop %v957
    %v959 = vsel %vm310, %v956, 0.0
    %960 = vadd.xlane.f32.xlu0 %v959
    %v961 = vpop.xlane.xlu0 %960
    %v962 = vsel %vm310, %v958, 0.0
    %963 = vadd.xlane.f32.xlu0 %v962
    %v964 = vpop.xlane.xlu0 %963
    %v965 = vpack.c.bf16 %v956, %v956
    %v966 = vpack.c.bf16 %v958, %v958
    %967 = vrot.lane.b32.xlu0 %v303, 112
    %v968 = vpop.permute.xlu0 %967
    %v970 = vsel %vm310, %v965, 0
    %v973 = vsel %vm430, %v968, 0
    %975 = vmatprep.subr.bf16.mxu0 0
    %976 = vmatpush1.bf16.msra.mxu0 %v973
    %977 = vmatprep.subr.bf16.mxu0 0
    %978 = vmatpush1.bf16.msra.mxu0 0
    %979 = vmatprep.subr.bf16.mxu0 0
    %980 = vmatpush1.bf16.msra.mxu0 0
    %981 = vmatprep.subr.bf16.mxu0 0
    %982 = vmatpush1.bf16.msra.mxu0 0
    %983 = vmatprep.subr.bf16.mxu0 0
    %984 = vmatpush1.bf16.msra.mxu0 0
    %985 = vmatprep.subr.bf16.mxu0 0
    %986 = vmatpush1.bf16.msra.mxu0 0
    %987 = vmatprep.subr.bf16.mxu0 0
    %988 = vmatpush1.bf16.msra.mxu0 0
    %989 = vmatprep.subr.bf16.mxu0 0
    %990 = vmatpush1.bf16.msra.mxu0 0
    %991 = vmatprep.subr.bf16.mxu0 0
    %992 = vmatpush1.bf16.msra.mxu0 0
    %993 = vmatprep.subr.bf16.mxu0 0
    %994 = vmatpush1.bf16.msra.mxu0 0
    %995 = vmatprep.subr.bf16.mxu0 0
    %996 = vmatpush1.bf16.msra.mxu0 0
    %997 = vmatprep.subr.bf16.mxu0 0
    %998 = vmatpush1.bf16.msra.mxu0 0
    %999 = vmatprep.subr.bf16.mxu0 0
    %1000 = vmatpush1.bf16.msra.mxu0 0
    %1001 = vmatprep.subr.bf16.mxu0 0
    %1002 = vmatpush1.bf16.msra.mxu0 0
    %1003 = vmatprep.subr.bf16.mxu0 0
    %1004 = vmatpush1.bf16.msra.mxu0 0
    %1005 = vmatprep.subr.bf16.mxu0 0
    %1006 = vmatpush1.bf16.msra.mxu0 0
    %1007 = vmatprep.mubr.bf16.mxu0 0
    %1008 = vmatmul.mubr.bf16.gmra.mrb[0].mxu0 %v970
    %v1009 = vpop.f32.mrb[0].mxu0
    %v1010 = vadd.f32 0.0, %v1009
    %v1011 = vpop.f32.mrb[0].mxu0
    %v1012 = vpop.f32.mrb[0].mxu0
    %v1013 = vpop.f32.mrb[0].mxu0
    %1014 = vdwg.mxu0
    %1015 = vrot.lane.b32.xlu0 %v304, 112
    %v1016 = vpop.permute.xlu0 %1015
    %v1018 = vsel %vm310, %v966, 0
    %v1021 = vsel %vm430, %v1016, 0
    %1023 = vmatprep.subr.bf16.mxu0 0
    %1024 = vmatpush1.bf16.msra.mxu0 %v1021
    %1025 = vmatprep.subr.bf16.mxu0 0
    %1026 = vmatpush1.bf16.msra.mxu0 0
    %1027 = vmatprep.subr.bf16.mxu0 0
    %1028 = vmatpush1.bf16.msra.mxu0 0
    %1029 = vmatprep.subr.bf16.mxu0 0
    %1030 = vmatpush1.bf16.msra.mxu0 0
    %1031 = vmatprep.subr.bf16.mxu0 0
    %1032 = vmatpush1.bf16.msra.mxu0 0
    %1033 = vmatprep.subr.bf16.mxu0 0
    %1034 = vmatpush1.bf16.msra.mxu0 0
    %1035 = vmatprep.subr.bf16.mxu0 0
    %1036 = vmatpush1.bf16.msra.mxu0 0
    %1037 = vmatprep.subr.bf16.mxu0 0
    %1038 = vmatpush1.bf16.msra.mxu0 0
    %1039 = vmatprep.subr.bf16.mxu0 0
    %1040 = vmatpush1.bf16.msra.mxu0 0
    %1041 = vmatprep.subr.bf16.mxu0 0
    %1042 = vmatpush1.bf16.msra.mxu0 0
    %1043 = vmatprep.subr.bf16.mxu0 0
    %1044 = vmatpush1.bf16.msra.mxu0 0
    %1045 = vmatprep.subr.bf16.mxu0 0
    %1046 = vmatpush1.bf16.msra.mxu0 0
    %1047 = vmatprep.subr.bf16.mxu0 0
    %1048 = vmatpush1.bf16.msra.mxu0 0
    %1049 = vmatprep.subr.bf16.mxu0 0
    %1050 = vmatpush1.bf16.msra.mxu0 0
    %1051 = vmatprep.subr.bf16.mxu0 0
    %1052 = vmatpush1.bf16.msra.mxu0 0
    %1053 = vmatprep.subr.bf16.mxu0 0
    %1054 = vmatpush1.bf16.msra.mxu0 0
    %1055 = vmatprep.mubr.bf16.mxu0 0
    %1056 = vmatmul.mubr.bf16.gmra.mrb[0].mxu0 %v1018
    %v1057 = vpop.f32.mrb[0].mxu0
    %v1058 = vadd.f32 0.0, %v1057
    %v1059 = vpop.f32.mrb[0].mxu0
    %v1060 = vpop.f32.mrb[0].mxu0
    %v1061 = vpop.f32.mrb[0].mxu0
    %1062 = vdwg.mxu0
    %v1063 = vrcp.pop %v961
    %v1064 = vrcp.pop %v964
    %v1065 = vmul.f32 %v1010, %v1063
    %v1066 = vmul.f32 %v1058, %v1064
    %v1067 = vpack.c.bf16 %v1066, %v1065
    %s1068 = scalar_lea.vmem [#allocation10], 8
    %v1069 = vld [vmem:[%s1068] sm:$0xf]
    %v1071 = vsel %vm310, %v1067, 0
    %v1074 = vsel %vm430, %v1069, 0
    %1076 = vmatprep.subr.bf16.mxu0 0
    %1077 = vmatpush1.bf16.msra.mxu0 %v1074
    %1078 = vmatprep.subr.bf16.mxu0 0
    %1079 = vmatpush1.bf16.msra.mxu0 0
    %1080 = vmatprep.subr.bf16.mxu0 0
    %1081 = vmatpush1.bf16.msra.mxu0 0
    %1082 = vmatprep.subr.bf16.mxu0 0
    %1083 = vmatpush1.bf16.msra.mxu0 0
    %1084 = vmatprep.subr.bf16.mxu0 0
    %1085 = vmatpush1.bf16.msra.mxu0 0
    %1086 = vmatprep.subr.bf16.mxu0 0
    %1087 = vmatpush1.bf16.msra.mxu0 0
    %1088 = vmatprep.subr.bf16.mxu0 0
    %1089 = vmatpush1.bf16.msra.mxu0 0
    %1090 = vmatprep.subr.bf16.mxu0 0
    %1091 = vmatpush1.bf16.msra.mxu0 0
    %1092 = vmatprep.subr.bf16.mxu0 0
    %1093 = vmatpush1.bf16.msra.mxu0 0
    %1094 = vmatprep.subr.bf16.mxu0 0
    %1095 = vmatpush1.bf16.msra.mxu0 0
    %1096 = vmatprep.subr.bf16.mxu0 0
    %1097 = vmatpush1.bf16.msra.mxu0 0
    %1098 = vmatprep.subr.bf16.mxu0 0
    %1099 = vmatpush1.bf16.msra.mxu0 0
    %1100 = vmatprep.subr.bf16.mxu0 0
    %1101 = vmatpush1.bf16.msra.mxu0 0
    %1102 = vmatprep.subr.bf16.mxu0 0
    %1103 = vmatpush1.bf16.msra.mxu0 0
    %1104 = vmatprep.subr.bf16.mxu0 0
    %1105 = vmatpush1.bf16.msra.mxu0 0
    %1106 = vmatprep.subr.bf16.mxu0 0
    %1107 = vmatpush1.bf16.msra.mxu0 0
    %1108 = vmatprep.mubr.bf16.mxu0 0
    %1109 = vmatmul.mubr.bf16.gmra.mrb[0].mxu0 %v1071
    %v1110 = vpop.f32.mrb[0].mxu0
    %v1111 = vadd.f32 0.0, %v1110
    %v1112 = vpop.f32.mrb[0].mxu0
    %v1113 = vpop.f32.mrb[0].mxu0
    %v1114 = vadd.f32 0.0, %v1113
    %v1115 = vpop.f32.mrb[0].mxu0
    %1116 = vdwg.mxu0
    %v1117 = vadd.f32 %v839, %v1111
    %v1118 = vadd.f32 %v842, %v1114
    %1119 = vrot.lane.b32.xlu0 %v293, 104
    %v1120 = vpop.permute.xlu0 %1119
    %1121 = vrot.lane.b32.xlu0 %v298, 104
    %v1122 = vpop.permute.xlu0 %1121
    %v1124 = vsel %vm310, %v1120, 0
    %v1127 = vsel %vm310, %v1122, 0
    %1129 = vmatprep.subr.bf16.mxu0 0
    %1130 = vmatpush1.bf16.xpose.msra.mxu0 %v1127
    %1131 = vmatprep.subr.bf16.mxu0 0
    %1132 = vmatpush1.bf16.xpose.msra.mxu0 0
    %1133 = vmatprep.subr.bf16.mxu0 0
    %1134 = vmatpush1.bf16.xpose.msra.mxu0 0
    %1135 = vmatprep.subr.bf16.mxu0 0
    %1136 = vmatpush1.bf16.xpose.msra.mxu0 0
    %1137 = vmatprep.subr.bf16.mxu0 0
    %1138 = vmatpush1.bf16.xpose.msra.mxu0 0
    %1139 = vmatprep.subr.bf16.mxu0 0
    %1140 = vmatpush1.bf16.xpose.msra.mxu0 0
    %1141 = vmatprep.subr.bf16.mxu0 0
    %1142 = vmatpush1.bf16.xpose.msra.mxu0 0
    %1143 = vmatprep.subr.bf16.mxu0 0
    %1144 = vmatpush1.bf16.xpose.msra.mxu0 0
    %1145 = vmatprep.subr.bf16.mxu0 0
    %1146 = vmatpush1.bf16.xpose.msra.mxu0 0
    %1147 = vmatprep.subr.bf16.mxu0 0
    %1148 = vmatpush1.bf16.xpose.msra.mxu0 0
    %1149 = vmatprep.subr.bf16.mxu0 0
    %1150 = vmatpush1.bf16.xpose.msra.mxu0 0
    %1151 = vmatprep.subr.bf16.mxu0 0
    %1152 = vmatpush1.bf16.xpose.msra.mxu0 0
    %1153 = vmatprep.subr.bf16.mxu0 0
    %1154 = vmatpush1.bf16.xpose.msra.mxu0 0
    %1155 = vmatprep.subr.bf16.mxu0 0
    %1156 = vmatpush1.bf16.xpose.msra.mxu0 0
    %1157 = vmatprep.subr.bf16.mxu0 0
    %1158 = vmatpush1.bf16.xpose.msra.mxu0 0
    %1159 = vmatprep.subr.bf16.mxu0 0
    %1160 = vmatpush1.bf16.xpose.msra.mxu0 0
    %1161 = vmatprep.mubr.bf16.mxu0 0
    %1162 = vmatmul.mubr.bf16.gmra.mrb[0].mxu0 %v1124
    %v1163 = vpop.f32.mrb[0].mxu0
    %v1164 = vadd.f32 0.0, %v1163
    %v1165 = vpop.f32.mrb[0].mxu0
    %v1166 = vpop.f32.mrb[0].mxu0
    %v1167 = vpop.f32.mrb[0].mxu0
    %1168 = vdwg.mxu0
    %1169 = vrot.lane.b32.xlu0 %v294, 104
    %v1170 = vpop.permute.xlu0 %1169
    %1171 = vrot.lane.b32.xlu0 %v299, 104
    %v1172 = vpop.permute.xlu0 %1171
    %v1174 = vsel %vm310, %v1170, 0
    %v1177 = vsel %vm310, %v1172, 0
    %1179 = vmatprep.subr.bf16.mxu0 0
    %1180 = vmatpush1.bf16.xpose.msra.mxu0 %v1177
    %1181 = vmatprep.subr.bf16.mxu0 0
    %1182 = vmatpush1.bf16.xpose.msra.mxu0 0
    %1183 = vmatprep.subr.bf16.mxu0 0
    %1184 = vmatpush1.bf16.xpose.msra.mxu0 0
    %1185 = vmatprep.subr.bf16.mxu0 0
    %1186 = vmatpush1.bf16.xpose.msra.mxu0 0
    %1187 = vmatprep.subr.bf16.mxu0 0
    %1188 = vmatpush1.bf16.xpose.msra.mxu0 0
    %1189 = vmatprep.subr.bf16.mxu0 0
    %1190 = vmatpush1.bf16.xpose.msra.mxu0 0
    %1191 = vmatprep.subr.bf16.mxu0 0
    %1192 = vmatpush1.bf16.xpose.msra.mxu0 0
    %1193 = vmatprep.subr.bf16.mxu0 0
    %1194 = vmatpush1.bf16.xpose.msra.mxu0 0
    %1195 = vmatprep.subr.bf16.mxu0 0
    %1196 = vmatpush1.bf16.xpose.msra.mxu0 0
    %1197 = vmatprep.subr.bf16.mxu0 0
    %1198 = vmatpush1.bf16.xpose.msra.mxu0 0
    %1199 = vmatprep.subr.bf16.mxu0 0
    %1200 = vmatpush1.bf16.xpose.msra.mxu0 0
    %1201 = vmatprep.subr.bf16.mxu0 0
    %1202 = vmatpush1.bf16.xpose.msra.mxu0 0
    %1203 = vmatprep.subr.bf16.mxu0 0
    %1204 = vmatpush1.bf16.xpose.msra.mxu0 0
    %1205 = vmatprep.subr.bf16.mxu0 0
    %1206 = vmatpush1.bf16.xpose.msra.mxu0 0
    %1207 = vmatprep.subr.bf16.mxu0 0
    %1208 = vmatpush1.bf16.xpose.msra.mxu0 0
    %1209 = vmatprep.subr.bf16.mxu0 0
    %1210 = vmatpush1.bf16.xpose.msra.mxu0 0
    %1211 = vmatprep.mubr.bf16.mxu0 0
    %1212 = vmatmul.mubr.bf16.gmra.mrb[0].mxu0 %v1174
    %v1213 = vpop.f32.mrb[0].mxu0
    %v1214 = vadd.f32 0.0, %v1213
    %v1215 = vpop.f32.mrb[0].mxu0
    %v1216 = vpop.f32.mrb[0].mxu0
    %v1217 = vpop.f32.mrb[0].mxu0
    %1218 = vdwg.mxu0
    %v1219 = vsel %vm404, %v1164, -inf
    %v1220 = vsel %vm404, %v1214, -inf
    %v1221 = vsel %vm310, %v1219, -inf
    %1222 = vmax.xlane.f32.xlu0 %v1221
    %v1223 = vpop.xlane.xlu0 %1222
    %v1224 = vsel %vm310, %v1220, -inf
    %1225 = vmax.xlane.f32.xlu0 %v1224
    %v1226 = vpop.xlane.xlu0 %1225
    %v1227 = vsub.f32 %v1219, %v1223
    %v1228 = vsub.f32 %v1220, %v1226
    %v1229 = vmul.f32 %v1227, 1.442695
    %v1230 = vpow.pop %v1229
    %v1231 = vmul.f32 %v1228, 1.442695
    %v1232 = vpow.pop %v1231
    %v1233 = vsel %vm310, %v1230, 0.0
    %1234 = vadd.xlane.f32.xlu0 %v1233
    %v1235 = vpop.xlane.xlu0 %1234
    %v1236 = vsel %vm310, %v1232, 0.0
    %1237 = vadd.xlane.f32.xlu0 %v1236
    %v1238 = vpop.xlane.xlu0 %1237
    %v1239 = vpack.c.bf16 %v1230, %v1230
    %v1240 = vpack.c.bf16 %v1232, %v1232
    %1241 = vrot.lane.b32.xlu0 %v303, 104
    %v1242 = vpop.permute.xlu0 %1241
    %v1244 = vsel %vm310, %v1239, 0
    %v1247 = vsel %vm430, %v1242, 0
    %1249 = vmatprep.subr.bf16.mxu0 0
    %1250 = vmatpush1.bf16.msra.mxu0 %v1247
    %1251 = vmatprep.subr.bf16.mxu0 0
    %1252 = vmatpush1.bf16.msra.mxu0 0
    %1253 = vmatprep.subr.bf16.mxu0 0
    %1254 = vmatpush1.bf16.msra.mxu0 0
    %1255 = vmatprep.subr.bf16.mxu0 0
    %1256 = vmatpush1.bf16.msra.mxu0 0
    %1257 = vmatprep.subr.bf16.mxu0 0
    %1258 = vmatpush1.bf16.msra.mxu0 0
    %1259 = vmatprep.subr.bf16.mxu0 0
    %1260 = vmatpush1.bf16.msra.mxu0 0
    %1261 = vmatprep.subr.bf16.mxu0 0
    %1262 = vmatpush1.bf16.msra.mxu0 0
    %1263 = vmatprep.subr.bf16.mxu0 0
    %1264 = vmatpush1.bf16.msra.mxu0 0
    %1265 = vmatprep.subr.bf16.mxu0 0
    %1266 = vmatpush1.bf16.msra.mxu0 0
    %1267 = vmatprep.subr.bf16.mxu0 0
    %1268 = vmatpush1.bf16.msra.mxu0 0
    %1269 = vmatprep.subr.bf16.mxu0 0
    %1270 = vmatpush1.bf16.msra.mxu0 0
    %1271 = vmatprep.subr.bf16.mxu0 0
    %1272 = vmatpush1.bf16.msra.mxu0 0
    %1273 = vmatprep.subr.bf16.mxu0 0
    %1274 = vmatpush1.bf16.msra.mxu0 0
    %1275 = vmatprep.subr.bf16.mxu0 0
    %1276 = vmatpush1.bf16.msra.mxu0 0
    %1277 = vmatprep.subr.bf16.mxu0 0
    %1278 = vmatpush1.bf16.msra.mxu0 0
    %1279 = vmatprep.subr.bf16.mxu0 0
    %1280 = vmatpush1.bf16.msra.mxu0 0
    %1281 = vmatprep.mubr.bf16.mxu0 0
    %1282 = vmatmul.mubr.bf16.gmra.mrb[0].mxu0 %v1244
    %v1283 = vpop.f32.mrb[0].mxu0
    %v1284 = vadd.f32 0.0, %v1283
    %v1285 = vpop.f32.mrb[0].mxu0
    %v1286 = vpop.f32.mrb[0].mxu0
    %v1287 = vpop.f32.mrb[0].mxu0
    %1288 = vdwg.mxu0
    %1289 = vrot.lane.b32.xlu0 %v304, 104
    %v1290 = vpop.permute.xlu0 %1289
    %v1292 = vsel %vm310, %v1240, 0
    %v1295 = vsel %vm430, %v1290, 0
    %1297 = vmatprep.subr.bf16.mxu0 0
    %1298 = vmatpush1.bf16.msra.mxu0 %v1295
    %1299 = vmatprep.subr.bf16.mxu0 0
    %1300 = vmatpush1.bf16.msra.mxu0 0
    %1301 = vmatprep.subr.bf16.mxu0 0
    %1302 = vmatpush1.bf16.msra.mxu0 0
    %1303 = vmatprep.subr.bf16.mxu0 0
    %1304 = vmatpush1.bf16.msra.mxu0 0
    %1305 = vmatprep.subr.bf16.mxu0 0
    %1306 = vmatpush1.bf16.msra.mxu0 0
    %1307 = vmatprep.subr.bf16.mxu0 0
    %1308 = vmatpush1.bf16.msra.mxu0 0
    %1309 = vmatprep.subr.bf16.mxu0 0
    %1310 = vmatpush1.bf16.msra.mxu0 0
    %1311 = vmatprep.subr.bf16.mxu0 0
    %1312 = vmatpush1.bf16.msra.mxu0 0
    %1313 = vmatprep.subr.bf16.mxu0 0
    %1314 = vmatpush1.bf16.msra.mxu0 0
    %1315 = vmatprep.subr.bf16.mxu0 0
    %1316 = vmatpush1.bf16.msra.mxu0 0
    %1317 = vmatprep.subr.bf16.mxu0 0
    %1318 = vmatpush1.bf16.msra.mxu0 0
    %1319 = vmatprep.subr.bf16.mxu0 0
    %1320 = vmatpush1.bf16.msra.mxu0 0
    %1321 = vmatprep.subr.bf16.mxu0 0
    %1322 = vmatpush1.bf16.msra.mxu0 0
    %1323 = vmatprep.subr.bf16.mxu0 0
    %1324 = vmatpush1.bf16.msra.mxu0 0
    %1325 = vmatprep.subr.bf16.mxu0 0
    %1326 = vmatpush1.bf16.msra.mxu0 0
    %1327 = vmatprep.subr.bf16.mxu0 0
    %1328 = vmatpush1.bf16.msra.mxu0 0
    %1329 = vmatprep.mubr.bf16.mxu0 0
    %1330 = vmatmul.mubr.bf16.gmra.mrb[0].mxu0 %v1292
    %v1331 = vpop.f32.mrb[0].mxu0
    %v1332 = vadd.f32 0.0, %v1331
    %v1333 = vpop.f32.mrb[0].mxu0
    %v1334 = vpop.f32.mrb[0].mxu0
    %v1335 = vpop.f32.mrb[0].mxu0
    %1336 = vdwg.mxu0
    %v1337 = vrcp.pop %v1235
    %v1338 = vrcp.pop %v1238
    %v1339 = vmul.f32 %v1284, %v1337
    %v1340 = vmul.f32 %v1332, %v1338
    %v1341 = vpack.c.bf16 %v1340, %v1339
    %s1342 = scalar_lea.vmem [#allocation10], 12
    %v1343 = vld [vmem:[%s1342] sm:$0xf]
    %v1345 = vsel %vm310, %v1341, 0
    %v1348 = vsel %vm430, %v1343, 0
    %1350 = vmatprep.subr.bf16.mxu0 0
    %1351 = vmatpush1.bf16.msra.mxu0 %v1348
    %1352 = vmatprep.subr.bf16.mxu0 0
    %1353 = vmatpush1.bf16.msra.mxu0 0
    %1354 = vmatprep.subr.bf16.mxu0 0
    %1355 = vmatpush1.bf16.msra.mxu0 0
    %1356 = vmatprep.subr.bf16.mxu0 0
    %1357 = vmatpush1.bf16.msra.mxu0 0
    %1358 = vmatprep.subr.bf16.mxu0 0
    %1359 = vmatpush1.bf16.msra.mxu0 0
    %1360 = vmatprep.subr.bf16.mxu0 0
    %1361 = vmatpush1.bf16.msra.mxu0 0
    %1362 = vmatprep.subr.bf16.mxu0 0
    %1363 = vmatpush1.bf16.msra.mxu0 0
    %1364 = vmatprep.subr.bf16.mxu0 0
    %1365 = vmatpush1.bf16.msra.mxu0 0
    %1366 = vmatprep.subr.bf16.mxu0 0
    %1367 = vmatpush1.bf16.msra.mxu0 0
    %1368 = vmatprep.subr.bf16.mxu0 0
    %1369 = vmatpush1.bf16.msra.mxu0 0
    %1370 = vmatprep.subr.bf16.mxu0 0
    %1371 = vmatpush1.bf16.msra.mxu0 0
    %1372 = vmatprep.subr.bf16.mxu0 0
    %1373 = vmatpush1.bf16.msra.mxu0 0
    %1374 = vmatprep.subr.bf16.mxu0 0
    %1375 = vmatpush1.bf16.msra.mxu0 0
    %1376 = vmatprep.subr.bf16.mxu0 0
    %1377 = vmatpush1.bf16.msra.mxu0 0
    %1378 = vmatprep.subr.bf16.mxu0 0
    %1379 = vmatpush1.bf16.msra.mxu0 0
    %1380 = vmatprep.subr.bf16.mxu0 0
    %1381 = vmatpush1.bf16.msra.mxu0 0
    %1382 = vmatprep.mubr.bf16.mxu0 0
    %1383 = vmatmul.mubr.bf16.gmra.mrb[0].mxu0 %v1345
    %v1384 = vpop.f32.mrb[0].mxu0
    %v1385 = vadd.f32 0.0, %v1384
    %v1386 = vpop.f32.mrb[0].mxu0
    %v1387 = vpop.f32.mrb[0].mxu0
    %v1388 = vadd.f32 0.0, %v1387
    %v1389 = vpop.f32.mrb[0].mxu0
    %1390 = vdwg.mxu0
    %v1391 = vadd.f32 %v1117, %v1385
    %v1392 = vadd.f32 %v1118, %v1388
    %v1393 = vld [vmem:[#allocation11] sm:$0x1]
    %v1395 = vlaneseq
    %v1396 = vshrl.u32 %v1395, 7
    %v1397 = vsub.s32 0, %v1396
    %v1398 = vrot.slane %v1393, %v1397
    %v1400 = vadd.f32 %v1391, %v1398
    %v1401 = vadd.f32 %v1392, %v1398
    %1402 = vst [vmem:[#allocation13] sm:$0xff] %v1400
    %1403 = vst [vmem:[#allocation13 + $0x8] sm:$0xff] %v1401
    // Predicated region
    $region50: #{tpu_custom_call.1} parent=1 // pred_check
      _
    $region51: #{tpu_custom_call.1} parent=1 // pred_check_branch
      %1405 = sbr.rel (0) target = $region53
    $region52: #{tpu_custom_call.1} parent=1 // pred_region
      %s1407 = ssub.s32 256, 256
      %1408 = vsyncadd [#allocation4], %s1407
      %s1409 = sshll.u32 [#allocation13], 4
      %s1410 = int_to_ptr.vmem [resolvable:$true] %s1409
      %1415 = dma.vmem_to_hbm [thread:$0]  %s1410, 256, %s6, [#allocation4], 128, 128, 8
    $region53: #{tpu_custom_call.1} parent=1 // pred_fallthru
      _
    // Predicated region
    $region54: #{tpu_custom_call.1} parent=1 // pred_check
      _
    $region55: #{tpu_custom_call.1} parent=1 // pred_check_branch
      %1417 = sbr.rel (0) target = $region57
    $region56: #{tpu_custom_call.1} parent=1 // pred_region
      %1418 = dma.done [#allocation4], 256
    $region57: #{tpu_custom_call.1} parent=1 // pred_fallthru
      _
    %1419 = vsyncpa [#allocation3], 1
    %1420 = vsyncpa [#allocation6], 1
    %1421 = vsyncpa [#allocation9], 1
    %1422 = vsyncpa [#allocation12], 1
    %1423 = vsyncpa [#allocation4], 1

</llo_original>
